<compile_context>
chip_gen: v6e
topology: v6e:2x2x1
jax: 0.10.0
libtpu: 0.0.40
codegen_flags: <defaults>
</compile_context>

<pallas_src>
import functools

import numpy as np
import jax
import jax.numpy as jnp
from jax.experimental import pallas as pl
from jax.experimental.pallas import tpu as pltpu


def _round_up(x, m):
    return (x + m - 1) // m * m


@functools.lru_cache(maxsize=None)
def _dft_basis_np(n_samples, num_fft_components):
    """Fused real-DFT basis [cos | sin] of shape (N, 2K), f32 (cast to bf16 later)."""
    n = np.arange(n_samples)[:, None]
    k = np.arange(num_fft_components)[None, :]
    phase = (n * k) % n_samples          # integer phase mod N keeps f32 args accurate
    angle = (2.0 * np.pi / n_samples) * phase
    basis = np.concatenate([np.cos(angle), np.sin(angle)], axis=1)
    return basis.astype(np.float32)      # (N, 2K)


def wve_kernel(x_ref, basis_ref, w1_ref, b1_ref, w2_ref, b2_ref, w3_ref, b3_ref,
               out_ref, *, num_fft_components):
    K = num_fft_components

    # In-kernel cast (VPU filler under the MXU-bound matmul); wrapper passes f32.
    x = x_ref[...].astype(jnp.bfloat16)                                   # (TB, N)

    # Partial real DFT: one (TB, N) x (N, 2K) bf16 matmul -> [Re | Im] in f32.
    ri = jnp.dot(x, basis_ref[...], preferred_element_type=jnp.float32)   # (TB, 2K)

    # |FFT|^2 kept 128-lane dense: roll swaps the Re/Im halves (XLU slot, free under
    # the MXU), so sq holds mag^2 duplicated in both halves.  Row max / sqrt over all
    # 2K lanes equals the max over the K magnitudes.  max == 0 -> 1.
    sq_all = ri * ri
    sq = sq_all + pltpu.roll(sq_all, shift=K, axis=1)                     # (TB, 2K)
    max_sq = jnp.max(sq, axis=1, keepdims=True)
    max_sq = jnp.where(max_sq == 0.0, 1.0, max_sq)
    h = jnp.sqrt(sq * pl.reciprocal(max_sq, approx=True))                 # (TB, 2K)

    # MLP: 2K -> 512 -> 256 -> vocab_padded.  w1 rows K:2K are zero, so the
    # duplicated Im half contributes nothing.  bf16 operands, f32 accumulation.
    h = jnp.dot(h.astype(jnp.bfloat16), w1_ref[...],
                preferred_element_type=jnp.float32) + b1_ref[...]
    h = jnp.maximum(h, 0.0)
    h = jnp.dot(h.astype(jnp.bfloat16), w2_ref[...],
                preferred_element_type=jnp.float32) + b2_ref[...]
    h = jnp.maximum(h, 0.0)
    out = jnp.dot(h.astype(jnp.bfloat16), w3_ref[...],
                  preferred_element_type=jnp.float32) + b3_ref[...]
    out_ref[...] = out                                                    # (TB, 128) f32


def _pick_batch_tile(b):
    """Rows per grid step.  Large B: big tiles (amortize per-step overhead, longer
    MXU M-streaming).  Small/medium B: aim for >= 2 grid programs so the 'parallel'
    batch axis can shard across v7x's 2 TensorCores; rows stay sublane-aligned."""
    if b >= 1024:
        return 512
    if b >= 512:
        return 256
    return min(128, _round_up(max(-(-b // 2), 1), 8))


def waveform_vector_embedding(x, params, num_fft_components=64):
    """x: (B, C, H, W) float32.  Returns (B, vocab_size) float32."""
    B = x.shape[0]
    N = int(np.prod(x.shape[1:]))
    K = num_fft_components

    w1, b1, w2, b2, w3, b3 = params
    H1 = w1.shape[1]
    H2 = w2.shape[1]
    vocab = w3.shape[1]
    VP = _round_up(vocab, 128)                  # lane-dense (unmasked) output stores

    # No dtype cast and (for B >= 8) no pad in the wrapper: the kernel reads the raw
    # f32 reshape directly.  Only tiny batches get padded to one full f32 sublane.
    waveforms = x.reshape(B, N)                                           # f32, free
    B_eff = B
    if B < 8:
        waveforms = jnp.pad(waveforms, ((0, 8 - B), (0, 0)))
        B_eff = 8

    TB = _pick_batch_tile(B_eff)
    grid = (pl.cdiv(B_eff, TB),)                # ragged final block handled by Pallas

    basis = jnp.asarray(_dft_basis_np(N, K), dtype=jnp.bfloat16)          # (N, 2K)

    w1p = jnp.pad(w1, ((0, K), (0, 0))).astype(jnp.bfloat16)              # (2K, H1)
    w2b = w2.astype(jnp.bfloat16)                                         # (H1, H2)
    w3p = jnp.pad(w3, ((0, 0), (0, VP - vocab))).astype(jnp.bfloat16)     # (H2, VP)
    b1f = b1.astype(jnp.float32).reshape(1, H1)
    b2f = b2.astype(jnp.float32).reshape(1, H2)
    b3p = jnp.pad(b3.astype(jnp.float32).reshape(1, vocab), ((0, 0), (0, VP - vocab)))

    in_specs = [
        pl.BlockSpec((TB, N), lambda i: (i, 0)),        # waveform tile (f32, cast in-kernel)
        pl.BlockSpec((N, 2 * K), lambda i: (0, 0)),     # DFT basis (resident)
        pl.BlockSpec((2 * K, H1), lambda i: (0, 0)),    # w1 zero-padded (resident)
        pl.BlockSpec((1, H1), lambda i: (0, 0)),        # b1
        pl.BlockSpec((H1, H2), lambda i: (0, 0)),       # w2 (resident)
        pl.BlockSpec((1, H2), lambda i: (0, 0)),        # b2
        pl.BlockSpec((H2, VP), lambda i: (0, 0)),       # w3 padded (resident)
        pl.BlockSpec((1, VP), lambda i: (0, 0)),        # b3 padded
    ]
    out_specs = pl.BlockSpec((TB, VP), lambda i: (i, 0))

    n_rows = grid[0] * TB
    flops = 2 * n_rows * N * (2 * K) + 2 * n_rows * (2 * K * H1 + H1 * H2 + H2 * VP)
    transcendentals = n_rows * (2 * K + 1)      # per-row sqrt(2K) + recip
    bytes_accessed = (B_eff * N * 4 + N * 2 * K * 2
                      + 2 * K * H1 * 2 + H1 * 4 + H1 * H2 * 2 + H2 * 4
                      + H2 * VP * 2 + VP * 4 + B_eff * VP * 4)

    out = pl.pallas_call(
        functools.partial(wve_kernel, num_fft_components=K),
        out_shape=jax.ShapeDtypeStruct((B_eff, VP), jnp.float32),
        grid=grid,
        in_specs=in_specs,
        out_specs=out_specs,
        compiler_params=pltpu.CompilerParams(
            dimension_semantics=("parallel",),
            vmem_limit_bytes=32 * 1024 * 1024,
        ),
        cost_estimate=pl.CostEstimate(
            flops=flops,
            transcendentals=transcendentals,
            bytes_accessed=bytes_accessed,
        ),
    )(waveforms, basis, w1p, b1f, w2b, b2f, w3p, b3p)

    return out[:B, :vocab]


def init_params(key, num_fft_components=64, vocab_size=8):
    """Deterministic synthetic parameters.  Weights stored as (in, out)."""
    ks = jax.random.split(key, 6)

    def lin(kw, kb, fan_in, fan_out):
        bound = 1.0 / np.sqrt(fan_in)
        w = jax.random.uniform(kw, (fan_in, fan_out), jnp.float32, -bound, bound)
        b = jax.random.uniform(kb, (1, fan_out), jnp.float32, -bound, bound)
        return w, b

    w1, b1 = lin(ks[0], ks[1], num_fft_components, 512)
    w2, b2 = lin(ks[2], ks[3], 512, 256)
    w3, b3 = lin(ks[4], ks[5], 256, vocab_size)
    return (w1, b1, w2, b2, w3, b3)


def reference(x, params, num_fft_components=64):
    """Pure-JAX (f32) reference mirroring the PyTorch forward."""
    B = x.shape[0]
    w = x.reshape(B, -1).astype(jnp.float32)
    mag = jnp.abs(jnp.fft.fft(w))[:, :num_fft_components].astype(jnp.float32)
    mx = jnp.max(mag, axis=1, keepdims=True)
    mx = jnp.where(mx == 0.0, 1.0, mx)
    h = mag / mx
    w1, b1, w2, b2, w3, b3 = params
    h = jnp.maximum(h @ w1 + b1, 0.0)
    h = jnp.maximum(h @ w2 + b2, 0.0)
    return h @ w3 + b3


if __name__ == "__main__":
    key = jax.random.PRNGKey(0)
    k_x, k_p = jax.random.split(key)

    B, C, H, W = 2, 4, 16, 16          # waveform length N = 1024, K = 64 FFT bins
    x = jax.random.normal(k_x, (B, C, H, W), dtype=jnp.float32)
    params = init_params(k_p, num_fft_components=64, vocab_size=8)

    fwd = jax.jit(waveform_vector_embedding, static_argnames=("num_fft_components",))
    out = jax.block_until_ready(fwd(x, params, num_fft_components=64))

    ref = jax.block_until_ready(reference(x, params, num_fft_components=64))
    err = float(jnp.max(jnp.abs(out - ref)))
    assert out.shape == (B, 8) and np.isfinite(err) and err < 5e-2, f"mismatch: {err}"

    print("KERNEL_OK")
</pallas_src>

<mosaic_0001>
module attributes {stable_mosaic.version = 11 : i64} {
  func.func @wve_kernel(%arg0: i32, %arg1: memref<8x1024xf32, #tpu.memory_space<vmem>>, %arg2: memref<1024x128xbf16, #tpu.memory_space<vmem>>, %arg3: memref<128x512xbf16, #tpu.memory_space<vmem>>, %arg4: memref<1x512xf32, #tpu.memory_space<vmem>>, %arg5: memref<512x256xbf16, #tpu.memory_space<vmem>>, %arg6: memref<1x256xf32, #tpu.memory_space<vmem>>, %arg7: memref<256x128xbf16, #tpu.memory_space<vmem>>, %arg8: memref<1x128xf32, #tpu.memory_space<vmem>>, %arg9: memref<8x128xf32, #tpu.memory_space<vmem>>) attributes {dimension_semantics = [#tpu.dimension_semantics<parallel>], iteration_bounds = array<i64: 1>, scalar_prefetch = 0 : i64, scratch_operands = 0 : i64, tpu.core_type = #tpu.core_type<tc>, window_params = [{transform_indices = @transform_0, window_bounds = array<i64: 8, 1024>}, {pipeline_mode = #tpu.pipeline_mode<synchronous>, transform_indices = @transform_1, window_bounds = array<i64: 1024, 128>}, {pipeline_mode = #tpu.pipeline_mode<synchronous>, transform_indices = @transform_2, window_bounds = array<i64: 128, 512>}, {pipeline_mode = #tpu.pipeline_mode<synchronous>, transform_indices = @transform_3, window_bounds = array<i64: 1, 512>}, {pipeline_mode = #tpu.pipeline_mode<synchronous>, transform_indices = @transform_4, window_bounds = array<i64: 512, 256>}, {pipeline_mode = #tpu.pipeline_mode<synchronous>, transform_indices = @transform_5, window_bounds = array<i64: 1, 256>}, {pipeline_mode = #tpu.pipeline_mode<synchronous>, transform_indices = @transform_6, window_bounds = array<i64: 256, 128>}, {pipeline_mode = #tpu.pipeline_mode<synchronous>, transform_indices = @transform_7, window_bounds = array<i64: 1, 128>}, {transform_indices = @transform_8, window_bounds = array<i64: 8, 128>}]} {
    %c0 = arith.constant 0 : index
    %c0_0 = arith.constant 0 : index
    %0 = vector.load %arg1[%c0, %c0_0] : memref<8x1024xf32, #tpu.memory_space<vmem>>, vector<8x1024xf32>
    %1 = arith.truncf %0 : vector<8x1024xf32> to vector<8x1024xbf16>
    %c0_1 = arith.constant 0 : index
    %c0_2 = arith.constant 0 : index
    %2 = vector.load %arg2[%c0_1, %c0_2] : memref<1024x128xbf16, #tpu.memory_space<vmem>>, vector<1024x128xbf16>
    %cst = arith.constant dense<0.000000e+00> : vector<8x128xf32>
    %3 = tpu.matmul %1, %2, %cst {dimension_numbers = #tpu.dot_dimension_numbers<[1], [0], [0], [1], [0, 0, 1, 1], [], []>} : vector<8x1024xbf16>, vector<1024x128xbf16>, vector<8x128xf32> -> vector<8x128xf32>
    %4 = arith.mulf %3, %3 : vector<8x128xf32>
    %c64_i32 = arith.constant 64 : i32
    %5 = tpu.dynamic_rotate %4 by %c64_i32 dim 1 : vector<8x128xf32>, i32 -> vector<8x128xf32>
    %6 = arith.addf %4, %5 : vector<8x128xf32>
    %cst_3 = arith.constant dense<0xFF800000> : vector<8xf32>
    %7 = vector.multi_reduction <maximumf>, %6, %cst_3 [1] : vector<8x128xf32> to vector<8xf32>
    %8 = vector.shape_cast %7 : vector<8xf32> to vector<8x1xf32>
    %cst_4 = arith.constant 0.000000e+00 : f32
    %9 = vector.broadcast %cst_4 : f32 to vector<8x1xf32>
    %10 = arith.cmpf oeq, %8, %9 : vector<8x1xf32>
    %cst_5 = arith.constant 1.000000e+00 : f32
    %11 = vector.broadcast %cst_5 : f32 to vector<8x1xf32>
    %12 = arith.select %10, %11, %8 : vector<8x1xi1>, vector<8x1xf32>
    %13 = tpu.reciprocal %12 {approx = true} : vector<8x1xf32> -> vector<8x1xf32>
    %14 = vector.broadcast %13 : vector<8x1xf32> to vector<8x128xf32>
    %15 = arith.mulf %6, %14 : vector<8x128xf32>
    %16 = math.sqrt %15 : vector<8x128xf32>
    %17 = arith.truncf %16 : vector<8x128xf32> to vector<8x128xbf16>
    %c0_6 = arith.constant 0 : index
    %c0_7 = arith.constant 0 : index
    %18 = vector.load %arg3[%c0_6, %c0_7] : memref<128x512xbf16, #tpu.memory_space<vmem>>, vector<128x512xbf16>
    %cst_8 = arith.constant dense<0.000000e+00> : vector<8x512xf32>
    %19 = tpu.matmul %17, %18, %cst_8 {dimension_numbers = #tpu.dot_dimension_numbers<[1], [0], [0], [1], [0, 0, 1, 1], [], []>} : vector<8x128xbf16>, vector<128x512xbf16>, vector<8x512xf32> -> vector<8x512xf32>
    %c0_9 = arith.constant 0 : index
    %c0_10 = arith.constant 0 : index
    %20 = vector.load %arg4[%c0_9, %c0_10] : memref<1x512xf32, #tpu.memory_space<vmem>>, vector<1x512xf32>
    %21 = vector.broadcast %20 : vector<1x512xf32> to vector<8x512xf32>
    %22 = arith.addf %19, %21 : vector<8x512xf32>
    %cst_11 = arith.constant 0.000000e+00 : f32
    %23 = vector.broadcast %cst_11 : f32 to vector<8x512xf32>
    %24 = arith.maximumf %22, %23 : vector<8x512xf32>
    %25 = arith.truncf %24 : vector<8x512xf32> to vector<8x512xbf16>
    %c0_12 = arith.constant 0 : index
    %c0_13 = arith.constant 0 : index
    %26 = vector.load %arg5[%c0_12, %c0_13] : memref<512x256xbf16, #tpu.memory_space<vmem>>, vector<512x256xbf16>
    %cst_14 = arith.constant dense<0.000000e+00> : vector<8x256xf32>
    %27 = tpu.matmul %25, %26, %cst_14 {dimension_numbers = #tpu.dot_dimension_numbers<[1], [0], [0], [1], [0, 0, 1, 1], [], []>} : vector<8x512xbf16>, vector<512x256xbf16>, vector<8x256xf32> -> vector<8x256xf32>
    %c0_15 = arith.constant 0 : index
    %c0_16 = arith.constant 0 : index
    %28 = vector.load %arg6[%c0_15, %c0_16] : memref<1x256xf32, #tpu.memory_space<vmem>>, vector<1x256xf32>
    %29 = vector.broadcast %28 : vector<1x256xf32> to vector<8x256xf32>
    %30 = arith.addf %27, %29 : vector<8x256xf32>
    %cst_17 = arith.constant 0.000000e+00 : f32
    %31 = vector.broadcast %cst_17 : f32 to vector<8x256xf32>
    %32 = arith.maximumf %30, %31 : vector<8x256xf32>
    %33 = arith.truncf %32 : vector<8x256xf32> to vector<8x256xbf16>
    %c0_18 = arith.constant 0 : index
    %c0_19 = arith.constant 0 : index
    %34 = vector.load %arg7[%c0_18, %c0_19] : memref<256x128xbf16, #tpu.memory_space<vmem>>, vector<256x128xbf16>
    %cst_20 = arith.constant dense<0.000000e+00> : vector<8x128xf32>
    %35 = tpu.matmul %33, %34, %cst_20 {dimension_numbers = #tpu.dot_dimension_numbers<[1], [0], [0], [1], [0, 0, 1, 1], [], []>} : vector<8x256xbf16>, vector<256x128xbf16>, vector<8x128xf32> -> vector<8x128xf32>
    %c0_21 = arith.constant 0 : index
    %c0_22 = arith.constant 0 : index
    %36 = vector.load %arg8[%c0_21, %c0_22] : memref<1x128xf32, #tpu.memory_space<vmem>>, vector<1x128xf32>
    %37 = vector.broadcast %36 : vector<1x128xf32> to vector<8x128xf32>
    %38 = arith.addf %35, %37 : vector<8x128xf32>
    %c0_23 = arith.constant 0 : index
    %c0_24 = arith.constant 0 : index
    %39 = vector.load %arg9[%c0_23, %c0_24] : memref<8x128xf32, #tpu.memory_space<vmem>>, vector<8x128xf32>
    tpu.vector_store %arg9[%c0_23, %c0_24], %38 {strides = array<i32>} : memref<8x128xf32, #tpu.memory_space<vmem>>, vector<8x128xf32>,
    return
  }
  func.func @transform_0(%arg0: i32) -> (i32, i32) {
    %c0_i32 = arith.constant 0 : i32
    %c0_i32_0 = arith.constant 0 : i32
    return %arg0, %c0_i32 : i32, i32
  }
  func.func @transform_1(%arg0: i32) -> (i32, i32) {
    %c0_i32 = arith.constant 0 : i32
    %c0_i32_0 = arith.constant 0 : i32
    %c0_i32_1 = arith.constant 0 : i32
    return %c0_i32, %c0_i32_0 : i32, i32
  }
  func.func @transform_2(%arg0: i32) -> (i32, i32) {
    %c0_i32 = arith.constant 0 : i32
    %c0_i32_0 = arith.constant 0 : i32
    %c0_i32_1 = arith.constant 0 : i32
    return %c0_i32, %c0_i32_0 : i32, i32
  }
  func.func @transform_3(%arg0: i32) -> (i32, i32) {
    %c0_i32 = arith.constant 0 : i32
    %c0_i32_0 = arith.constant 0 : i32
    %c0_i32_1 = arith.constant 0 : i32
    return %c0_i32, %c0_i32_0 : i32, i32
  }
  func.func @transform_4(%arg0: i32) -> (i32, i32) {
    %c0_i32 = arith.constant 0 : i32
    %c0_i32_0 = arith.constant 0 : i32
    %c0_i32_1 = arith.constant 0 : i32
    return %c0_i32, %c0_i32_0 : i32, i32
  }
  func.func @transform_5(%arg0: i32) -> (i32, i32) {
    %c0_i32 = arith.constant 0 : i32
    %c0_i32_0 = arith.constant 0 : i32
    %c0_i32_1 = arith.constant 0 : i32
    return %c0_i32, %c0_i32_0 : i32, i32
  }
  func.func @transform_6(%arg0: i32) -> (i32, i32) {
    %c0_i32 = arith.constant 0 : i32
    %c0_i32_0 = arith.constant 0 : i32
    %c0_i32_1 = arith.constant 0 : i32
    return %c0_i32, %c0_i32_0 : i32, i32
  }
  func.func @transform_7(%arg0: i32) -> (i32, i32) {
    %c0_i32 = arith.constant 0 : i32
    %c0_i32_0 = arith.constant 0 : i32
    %c0_i32_1 = arith.constant 0 : i32
    return %c0_i32, %c0_i32_0 : i32, i32
  }
  func.func @transform_8(%arg0: i32) -> (i32, i32) {
    %c0_i32 = arith.constant 0 : i32
    %c0_i32_0 = arith.constant 0 : i32
    return %arg0, %c0_i32 : i32, i32
  }
}

</mosaic_0001>

<llo_original>
// kernel: waveform_vector_embedding.1
$region0: #{waveform_vector_embedding.1}
  #allocation0 [shape = 'u32[]', space=smem, size = 0x4, offset = 0x4, fixed_abs, tag = 'smem constant byte address 0x4 - core index']
  #allocation1 [shape = 'u32[144,128]{1,0:T(1,128)}', space=vmem, size = 0x12000, scoped, tag = 'internal scratch']
  %s0 = inlined_call_operand.vmem [shape: f32[8,1024], index: 0, kind: input, shape index: {}]
  %s1 = inlined_call_operand.vmem [shape: bf16[1024,128], index: 1, kind: input, shape index: {}]
  %s2 = inlined_call_operand.vmem [shape: bf16[128,512], index: 2, kind: input, shape index: {}]
  %s3 = inlined_call_operand.vmem [shape: f32[1,512], index: 3, kind: input, shape index: {}]
  %s4 = inlined_call_operand.vmem [shape: bf16[512,256], index: 4, kind: input, shape index: {}]
  %s5 = inlined_call_operand.vmem [shape: f32[1,256], index: 5, kind: input, shape index: {}]
  %s6 = inlined_call_operand.vmem [shape: bf16[256,128], index: 6, kind: input, shape index: {}]
  %s7 = inlined_call_operand.vmem [shape: f32[1,128], index: 7, kind: input, shape index: {}]
  %s8 = inlined_call_operand.vmem [shape: f32[8,128], index: 8, kind: output, shape index: {}]
  %s9 = sld [smem:[#allocation0]]
  $region42: #{waveform_vector_embedding.1} parent=0
    _
  %s11 = ssub.s32 1, %s9
  %s12 = scalar_select 0, %s11, %s9
  // Predicated region
  $region2: #{waveform_vector_embedding.1} parent=0 // pred_check
    _
  $region3: #{waveform_vector_embedding.1} parent=0 // pred_check_branch
    %14 = sbr.rel (0) target = $region5
  $region4: #{waveform_vector_embedding.1} parent=0 // pred_region
    _
  $region5: #{waveform_vector_embedding.1} parent=0 // pred_fallthru
    _
  // Predicated region
  $region6: #{waveform_vector_embedding.1} parent=0 // pred_check
    _
  $region7: #{waveform_vector_embedding.1} parent=0 // pred_check_branch
    %16 = sbr.rel (0) target = $region9
  $region8: #{waveform_vector_embedding.1} parent=0 // pred_region
    _
  $region9: #{waveform_vector_embedding.1} parent=0 // pred_fallthru
    _
  // Predicated region
  $region10: #{waveform_vector_embedding.1} parent=0 // pred_check
    _
  $region11: #{waveform_vector_embedding.1} parent=0 // pred_check_branch
    %18 = sbr.rel (0) target = $region13
  $region12: #{waveform_vector_embedding.1} parent=0 // pred_region
    _
  $region13: #{waveform_vector_embedding.1} parent=0 // pred_fallthru
    _
  // Predicated region
  $region14: #{waveform_vector_embedding.1} parent=0 // pred_check
    _
  $region15: #{waveform_vector_embedding.1} parent=0 // pred_check_branch
    %20 = sbr.rel (0) target = $region17
  $region16: #{waveform_vector_embedding.1} parent=0 // pred_region
    _
  $region17: #{waveform_vector_embedding.1} parent=0 // pred_fallthru
    _
  // Predicated region
  $region18: #{waveform_vector_embedding.1} parent=0 // pred_check
    _
  $region19: #{waveform_vector_embedding.1} parent=0 // pred_check_branch
    %22 = sbr.rel (0) target = $region21
  $region20: #{waveform_vector_embedding.1} parent=0 // pred_region
    _
  $region21: #{waveform_vector_embedding.1} parent=0 // pred_fallthru
    _
  // Predicated region
  $region22: #{waveform_vector_embedding.1} parent=0 // pred_check
    _
  $region23: #{waveform_vector_embedding.1} parent=0 // pred_check_branch
    %24 = sbr.rel (0) target = $region25
  $region24: #{waveform_vector_embedding.1} parent=0 // pred_region
    _
  $region25: #{waveform_vector_embedding.1} parent=0 // pred_fallthru
    _
  // Predicated region
  $region26: #{waveform_vector_embedding.1} parent=0 // pred_check
    _
  $region27: #{waveform_vector_embedding.1} parent=0 // pred_check_branch
    %26 = sbr.rel (0) target = $region29
  $region28: #{waveform_vector_embedding.1} parent=0 // pred_region
    _
  $region29: #{waveform_vector_embedding.1} parent=0 // pred_fallthru
    _
  // Predicated region
  $region30: #{waveform_vector_embedding.1} parent=0 // pred_check
    _
  $region31: #{waveform_vector_embedding.1} parent=0 // pred_check_branch
    %28 = sbr.rel (0) target = $region33
  $region32: #{waveform_vector_embedding.1} parent=0 // pred_region
    _
  $region33: #{waveform_vector_embedding.1} parent=0 // pred_fallthru
    _
  %v30 = vld [vmem:[%s0] sm:$0xff]
  %v31 = vld [vmem:[%s0 + $0x8] sm:$0xff]
  %v32 = vld [vmem:[%s0 + $0x10] sm:$0xff]
  %v33 = vld [vmem:[%s0 + $0x18] sm:$0xff]
  %v34 = vld [vmem:[%s0 + $0x20] sm:$0xff]
  %v35 = vld [vmem:[%s0 + $0x28] sm:$0xff]
  %v36 = vld [vmem:[%s0 + $0x30] sm:$0xff]
  %v37 = vld [vmem:[%s0 + $0x38] sm:$0xff]
  %v38 = vpack.c.bf16 %v30, %v30
  %v39 = vpack.c.bf16 %v31, %v31
  %v40 = vpack.c.bf16 %v32, %v32
  %v41 = vpack.c.bf16 %v33, %v33
  %v42 = vpack.c.bf16 %v34, %v34
  %v43 = vpack.c.bf16 %v35, %v35
  %v44 = vpack.c.bf16 %v36, %v36
  %v45 = vpack.c.bf16 %v37, %v37
  %v46 = vld [vmem:[%s1] sm:$0xf]
  %v47 = vld [vmem:[%s1 + $0x4] sm:$0xf]
  %v48 = vld [vmem:[%s1 + $0x8] sm:$0xf]
  %v49 = vld [vmem:[%s1 + $0xc] sm:$0xf]
  %v50 = vld [vmem:[%s1 + $0x10] sm:$0xf]
  %v51 = vld [vmem:[%s1 + $0x14] sm:$0xf]
  %v52 = vld [vmem:[%s1 + $0x18] sm:$0xf]
  %v53 = vld [vmem:[%s1 + $0x1c] sm:$0xf]
  %v54 = vld [vmem:[%s1 + $0x20] sm:$0xf]
  %v55 = vld [vmem:[%s1 + $0x24] sm:$0xf]
  %v56 = vld [vmem:[%s1 + $0x28] sm:$0xf]
  %v57 = vld [vmem:[%s1 + $0x2c] sm:$0xf]
  %v58 = vld [vmem:[%s1 + $0x30] sm:$0xf]
  %v59 = vld [vmem:[%s1 + $0x34] sm:$0xf]
  %v60 = vld [vmem:[%s1 + $0x38] sm:$0xf]
  %v61 = vld [vmem:[%s1 + $0x3c] sm:$0xf]
  %v62 = vld [vmem:[%s1 + $0x40] sm:$0xf]
  %v63 = vld [vmem:[%s1 + $0x44] sm:$0xf]
  %v64 = vld [vmem:[%s1 + $0x48] sm:$0xf]
  %v65 = vld [vmem:[%s1 + $0x4c] sm:$0xf]
  %v66 = vld [vmem:[%s1 + $0x50] sm:$0xf]
  %v67 = vld [vmem:[%s1 + $0x54] sm:$0xf]
  %v68 = vld [vmem:[%s1 + $0x58] sm:$0xf]
  %v69 = vld [vmem:[%s1 + $0x5c] sm:$0xf]
  %v70 = vld [vmem:[%s1 + $0x60] sm:$0xf]
  %v71 = vld [vmem:[%s1 + $0x64] sm:$0xf]
  %v72 = vld [vmem:[%s1 + $0x68] sm:$0xf]
  %v73 = vld [vmem:[%s1 + $0x6c] sm:$0xf]
  %v74 = vld [vmem:[%s1 + $0x70] sm:$0xf]
  %v75 = vld [vmem:[%s1 + $0x74] sm:$0xf]
  %v76 = vld [vmem:[%s1 + $0x78] sm:$0xf]
  %v77 = vld [vmem:[%s1 + $0x7c] sm:$0xf]
  %v78 = vld [vmem:[%s1 + $0x80] sm:$0xf]
  %v79 = vld [vmem:[%s1 + $0x84] sm:$0xf]
  %v80 = vld [vmem:[%s1 + $0x88] sm:$0xf]
  %v81 = vld [vmem:[%s1 + $0x8c] sm:$0xf]
  %v82 = vld [vmem:[%s1 + $0x90] sm:$0xf]
  %v83 = vld [vmem:[%s1 + $0x94] sm:$0xf]
  %v84 = vld [vmem:[%s1 + $0x98] sm:$0xf]
  %v85 = vld [vmem:[%s1 + $0x9c] sm:$0xf]
  %v86 = vld [vmem:[%s1 + $0xa0] sm:$0xf]
  %v87 = vld [vmem:[%s1 + $0xa4] sm:$0xf]
  %v88 = vld [vmem:[%s1 + $0xa8] sm:$0xf]
  %v89 = vld [vmem:[%s1 + $0xac] sm:$0xf]
  %v90 = vld [vmem:[%s1 + $0xb0] sm:$0xf]
  %v91 = vld [vmem:[%s1 + $0xb4] sm:$0xf]
  %v92 = vld [vmem:[%s1 + $0xb8] sm:$0xf]
  %v93 = vld [vmem:[%s1 + $0xbc] sm:$0xf]
  %v94 = vld [vmem:[%s1 + $0xc0] sm:$0xf]
  %v95 = vld [vmem:[%s1 + $0xc4] sm:$0xf]
  %v96 = vld [vmem:[%s1 + $0xc8] sm:$0xf]
  %v97 = vld [vmem:[%s1 + $0xcc] sm:$0xf]
  %v98 = vld [vmem:[%s1 + $0xd0] sm:$0xf]
  %v99 = vld [vmem:[%s1 + $0xd4] sm:$0xf]
  %v100 = vld [vmem:[%s1 + $0xd8] sm:$0xf]
  %v101 = vld [vmem:[%s1 + $0xdc] sm:$0xf]
  %v102 = vld [vmem:[%s1 + $0xe0] sm:$0xf]
  %v103 = vld [vmem:[%s1 + $0xe4] sm:$0xf]
  %v104 = vld [vmem:[%s1 + $0xe8] sm:$0xf]
  %v105 = vld [vmem:[%s1 + $0xec] sm:$0xf]
  %v106 = vld [vmem:[%s1 + $0xf0] sm:$0xf]
  %v107 = vld [vmem:[%s1 + $0xf4] sm:$0xf]
  %v108 = vld [vmem:[%s1 + $0xf8] sm:$0xf]
  %v109 = vld [vmem:[%s1 + $0xfc] sm:$0xf]
  %v110 = vld [vmem:[%s1 + $0x100] sm:$0xf]
  %v111 = vld [vmem:[%s1 + $0x104] sm:$0xf]
  %v112 = vld [vmem:[%s1 + $0x108] sm:$0xf]
  %v113 = vld [vmem:[%s1 + $0x10c] sm:$0xf]
  %v114 = vld [vmem:[%s1 + $0x110] sm:$0xf]
  %v115 = vld [vmem:[%s1 + $0x114] sm:$0xf]
  %v116 = vld [vmem:[%s1 + $0x118] sm:$0xf]
  %v117 = vld [vmem:[%s1 + $0x11c] sm:$0xf]
  %v118 = vld [vmem:[%s1 + $0x120] sm:$0xf]
  %v119 = vld [vmem:[%s1 + $0x124] sm:$0xf]
  %v120 = vld [vmem:[%s1 + $0x128] sm:$0xf]
  %v121 = vld [vmem:[%s1 + $0x12c] sm:$0xf]
  %v122 = vld [vmem:[%s1 + $0x130] sm:$0xf]
  %v123 = vld [vmem:[%s1 + $0x134] sm:$0xf]
  %v124 = vld [vmem:[%s1 + $0x138] sm:$0xf]
  %v125 = vld [vmem:[%s1 + $0x13c] sm:$0xf]
  %v126 = vld [vmem:[%s1 + $0x140] sm:$0xf]
  %v127 = vld [vmem:[%s1 + $0x144] sm:$0xf]
  %v128 = vld [vmem:[%s1 + $0x148] sm:$0xf]
  %v129 = vld [vmem:[%s1 + $0x14c] sm:$0xf]
  %v130 = vld [vmem:[%s1 + $0x150] sm:$0xf]
  %v131 = vld [vmem:[%s1 + $0x154] sm:$0xf]
  %v132 = vld [vmem:[%s1 + $0x158] sm:$0xf]
  %v133 = vld [vmem:[%s1 + $0x15c] sm:$0xf]
  %v134 = vld [vmem:[%s1 + $0x160] sm:$0xf]
  %v135 = vld [vmem:[%s1 + $0x164] sm:$0xf]
  %v136 = vld [vmem:[%s1 + $0x168] sm:$0xf]
  %v137 = vld [vmem:[%s1 + $0x16c] sm:$0xf]
  %v138 = vld [vmem:[%s1 + $0x170] sm:$0xf]
  %v139 = vld [vmem:[%s1 + $0x174] sm:$0xf]
  %v140 = vld [vmem:[%s1 + $0x178] sm:$0xf]
  %v141 = vld [vmem:[%s1 + $0x17c] sm:$0xf]
  %v142 = vld [vmem:[%s1 + $0x180] sm:$0xf]
  %v143 = vld [vmem:[%s1 + $0x184] sm:$0xf]
  %v144 = vld [vmem:[%s1 + $0x188] sm:$0xf]
  %v145 = vld [vmem:[%s1 + $0x18c] sm:$0xf]
  %v146 = vld [vmem:[%s1 + $0x190] sm:$0xf]
  %v147 = vld [vmem:[%s1 + $0x194] sm:$0xf]
  %v148 = vld [vmem:[%s1 + $0x198] sm:$0xf]
  %v149 = vld [vmem:[%s1 + $0x19c] sm:$0xf]
  %v150 = vld [vmem:[%s1 + $0x1a0] sm:$0xf]
  %v151 = vld [vmem:[%s1 + $0x1a4] sm:$0xf]
  %v152 = vld [vmem:[%s1 + $0x1a8] sm:$0xf]
  %v153 = vld [vmem:[%s1 + $0x1ac] sm:$0xf]
  %v154 = vld [vmem:[%s1 + $0x1b0] sm:$0xf]
  %v155 = vld [vmem:[%s1 + $0x1b4] sm:$0xf]
  %v156 = vld [vmem:[%s1 + $0x1b8] sm:$0xf]
  %v157 = vld [vmem:[%s1 + $0x1bc] sm:$0xf]
  %v158 = vld [vmem:[%s1 + $0x1c0] sm:$0xf]
  %v159 = vld [vmem:[%s1 + $0x1c4] sm:$0xf]
  %v160 = vld [vmem:[%s1 + $0x1c8] sm:$0xf]
  %v161 = vld [vmem:[%s1 + $0x1cc] sm:$0xf]
  %v162 = vld [vmem:[%s1 + $0x1d0] sm:$0xf]
  %v163 = vld [vmem:[%s1 + $0x1d4] sm:$0xf]
  %v164 = vld [vmem:[%s1 + $0x1d8] sm:$0xf]
  %v165 = vld [vmem:[%s1 + $0x1dc] sm:$0xf]
  %v166 = vld [vmem:[%s1 + $0x1e0] sm:$0xf]
  %v167 = vld [vmem:[%s1 + $0x1e4] sm:$0xf]
  %v168 = vld [vmem:[%s1 + $0x1e8] sm:$0xf]
  %v169 = vld [vmem:[%s1 + $0x1ec] sm:$0xf]
  %v170 = vld [vmem:[%s1 + $0x1f0] sm:$0xf]
  %v171 = vld [vmem:[%s1 + $0x1f4] sm:$0xf]
  %v172 = vld [vmem:[%s1 + $0x1f8] sm:$0xf]
  %v173 = vld [vmem:[%s1 + $0x1fc] sm:$0xf]
  %v302 = vunpack.c.l.b16 %v46
  %v303 = vunpack.c.l.b16 %v47
  %v304 = vunpack.c.l.b16 %v48
  %v305 = vunpack.c.l.b16 %v49
  %v306 = vunpack.c.l.b16 %v50
  %v307 = vunpack.c.l.b16 %v51
  %v308 = vunpack.c.l.b16 %v52
  %v309 = vunpack.c.l.b16 %v53
  %v310 = vunpack.c.l.b16 %v54
  %v311 = vunpack.c.l.b16 %v55
  %v312 = vunpack.c.l.b16 %v56
  %v313 = vunpack.c.l.b16 %v57
  %v314 = vunpack.c.l.b16 %v58
  %v315 = vunpack.c.l.b16 %v59
  %v316 = vunpack.c.l.b16 %v60
  %v317 = vunpack.c.l.b16 %v61
  %v318 = vunpack.c.l.b16 %v62
  %v319 = vunpack.c.l.b16 %v63
  %v320 = vunpack.c.l.b16 %v64
  %v321 = vunpack.c.l.b16 %v65
  %v322 = vunpack.c.l.b16 %v66
  %v323 = vunpack.c.l.b16 %v67
  %v324 = vunpack.c.l.b16 %v68
  %v325 = vunpack.c.l.b16 %v69
  %v326 = vunpack.c.l.b16 %v70
  %v327 = vunpack.c.l.b16 %v71
  %v328 = vunpack.c.l.b16 %v72
  %v329 = vunpack.c.l.b16 %v73
  %v330 = vunpack.c.l.b16 %v74
  %v331 = vunpack.c.l.b16 %v75
  %v332 = vunpack.c.l.b16 %v76
  %v333 = vunpack.c.l.b16 %v77
  %v334 = vunpack.c.l.b16 %v78
  %v335 = vunpack.c.l.b16 %v79
  %v336 = vunpack.c.l.b16 %v80
  %v337 = vunpack.c.l.b16 %v81
  %v338 = vunpack.c.l.b16 %v82
  %v339 = vunpack.c.l.b16 %v83
  %v340 = vunpack.c.l.b16 %v84
  %v341 = vunpack.c.l.b16 %v85
  %v342 = vunpack.c.l.b16 %v86
  %v343 = vunpack.c.l.b16 %v87
  %v344 = vunpack.c.l.b16 %v88
  %v345 = vunpack.c.l.b16 %v89
  %v346 = vunpack.c.l.b16 %v90
  %v347 = vunpack.c.l.b16 %v91
  %v348 = vunpack.c.l.b16 %v92
  %v349 = vunpack.c.l.b16 %v93
  %v350 = vunpack.c.l.b16 %v94
  %v351 = vunpack.c.l.b16 %v95
  %v352 = vunpack.c.l.b16 %v96
  %v353 = vunpack.c.l.b16 %v97
  %v354 = vunpack.c.l.b16 %v98
  %v355 = vunpack.c.l.b16 %v99
  %v356 = vunpack.c.l.b16 %v100
  %v357 = vunpack.c.l.b16 %v101
  %v358 = vunpack.c.l.b16 %v102
  %v359 = vunpack.c.l.b16 %v103
  %v360 = vunpack.c.l.b16 %v104
  %v361 = vunpack.c.l.b16 %v105
  %v362 = vunpack.c.l.b16 %v106
  %v363 = vunpack.c.l.b16 %v107
  %v364 = vunpack.c.l.b16 %v108
  %v365 = vunpack.c.l.b16 %v109
  %v366 = vunpack.c.l.b16 %v110
  %v367 = vunpack.c.l.b16 %v111
  %v368 = vunpack.c.l.b16 %v112
  %v369 = vunpack.c.l.b16 %v113
  %v370 = vunpack.c.l.b16 %v114
  %v371 = vunpack.c.l.b16 %v115
  %v372 = vunpack.c.l.b16 %v116
  %v373 = vunpack.c.l.b16 %v117
  %v374 = vunpack.c.l.b16 %v118
  %v375 = vunpack.c.l.b16 %v119
  %v376 = vunpack.c.l.b16 %v120
  %v377 = vunpack.c.l.b16 %v121
  %v378 = vunpack.c.l.b16 %v122
  %v379 = vunpack.c.l.b16 %v123
  %v380 = vunpack.c.l.b16 %v124
  %v381 = vunpack.c.l.b16 %v125
  %v382 = vunpack.c.l.b16 %v126
  %v383 = vunpack.c.l.b16 %v127
  %v384 = vunpack.c.l.b16 %v128
  %v385 = vunpack.c.l.b16 %v129
  %v386 = vunpack.c.l.b16 %v130
  %v387 = vunpack.c.l.b16 %v131
  %v388 = vunpack.c.l.b16 %v132
  %v389 = vunpack.c.l.b16 %v133
  %v390 = vunpack.c.l.b16 %v134
  %v391 = vunpack.c.l.b16 %v135
  %v392 = vunpack.c.l.b16 %v136
  %v393 = vunpack.c.l.b16 %v137
  %v394 = vunpack.c.l.b16 %v138
  %v395 = vunpack.c.l.b16 %v139
  %v396 = vunpack.c.l.b16 %v140
  %v397 = vunpack.c.l.b16 %v141
  %v398 = vunpack.c.l.b16 %v142
  %v399 = vunpack.c.l.b16 %v143
  %v400 = vunpack.c.l.b16 %v144
  %v401 = vunpack.c.l.b16 %v145
  %v402 = vunpack.c.l.b16 %v146
  %v403 = vunpack.c.l.b16 %v147
  %v404 = vunpack.c.l.b16 %v148
  %v405 = vunpack.c.l.b16 %v149
  %v406 = vunpack.c.l.b16 %v150
  %v407 = vunpack.c.l.b16 %v151
  %v408 = vunpack.c.l.b16 %v152
  %v409 = vunpack.c.l.b16 %v153
  %v410 = vunpack.c.l.b16 %v154
  %v411 = vunpack.c.l.b16 %v155
  %v412 = vunpack.c.l.b16 %v156
  %v413 = vunpack.c.l.b16 %v157
  %v414 = vunpack.c.l.b16 %v158
  %v415 = vunpack.c.l.b16 %v159
  %v416 = vunpack.c.l.b16 %v160
  %v417 = vunpack.c.l.b16 %v161
  %v418 = vunpack.c.l.b16 %v162
  %v419 = vunpack.c.l.b16 %v163
  %v420 = vunpack.c.l.b16 %v164
  %v421 = vunpack.c.l.b16 %v165
  %v422 = vunpack.c.l.b16 %v166
  %v423 = vunpack.c.l.b16 %v167
  %v424 = vunpack.c.l.b16 %v168
  %v425 = vunpack.c.l.b16 %v169
  %v426 = vunpack.c.l.b16 %v170
  %v427 = vunpack.c.l.b16 %v171
  %v428 = vunpack.c.l.b16 %v172
  %v429 = vunpack.c.l.b16 %v173
  %v430 = vpack.c.b16 %v303, %v302
  %v431 = vpack.c.b16 %v305, %v304
  %v432 = vpack.c.b16 %v307, %v306
  %v433 = vpack.c.b16 %v309, %v308
  %v434 = vpack.c.b16 %v311, %v310
  %v435 = vpack.c.b16 %v313, %v312
  %v436 = vpack.c.b16 %v315, %v314
  %v437 = vpack.c.b16 %v317, %v316
  %v438 = vpack.c.b16 %v319, %v318
  %v439 = vpack.c.b16 %v321, %v320
  %v440 = vpack.c.b16 %v323, %v322
  %v441 = vpack.c.b16 %v325, %v324
  %v442 = vpack.c.b16 %v327, %v326
  %v443 = vpack.c.b16 %v329, %v328
  %v444 = vpack.c.b16 %v331, %v330
  %v445 = vpack.c.b16 %v333, %v332
  %v446 = vpack.c.b16 %v335, %v334
  %v447 = vpack.c.b16 %v337, %v336
  %v448 = vpack.c.b16 %v339, %v338
  %v449 = vpack.c.b16 %v341, %v340
  %v450 = vpack.c.b16 %v343, %v342
  %v451 = vpack.c.b16 %v345, %v344
  %v452 = vpack.c.b16 %v347, %v346
  %v453 = vpack.c.b16 %v349, %v348
  %v454 = vpack.c.b16 %v351, %v350
  %v455 = vpack.c.b16 %v353, %v352
  %v456 = vpack.c.b16 %v355, %v354
  %v457 = vpack.c.b16 %v357, %v356
  %v458 = vpack.c.b16 %v359, %v358
  %v459 = vpack.c.b16 %v361, %v360
  %v460 = vpack.c.b16 %v363, %v362
  %v461 = vpack.c.b16 %v365, %v364
  %v462 = vpack.c.b16 %v367, %v366
  %v463 = vpack.c.b16 %v369, %v368
  %v464 = vpack.c.b16 %v371, %v370
  %v465 = vpack.c.b16 %v373, %v372
  %v466 = vpack.c.b16 %v375, %v374
  %v467 = vpack.c.b16 %v377, %v376
  %v468 = vpack.c.b16 %v379, %v378
  %v469 = vpack.c.b16 %v381, %v380
  %v470 = vpack.c.b16 %v383, %v382
  %v471 = vpack.c.b16 %v385, %v384
  %v472 = vpack.c.b16 %v387, %v386
  %v473 = vpack.c.b16 %v389, %v388
  %v474 = vpack.c.b16 %v391, %v390
  %v475 = vpack.c.b16 %v393, %v392
  %v476 = vpack.c.b16 %v395, %v394
  %v477 = vpack.c.b16 %v397, %v396
  %v478 = vpack.c.b16 %v399, %v398
  %v479 = vpack.c.b16 %v401, %v400
  %v480 = vpack.c.b16 %v403, %v402
  %v481 = vpack.c.b16 %v405, %v404
  %v482 = vpack.c.b16 %v407, %v406
  %v483 = vpack.c.b16 %v409, %v408
  %v484 = vpack.c.b16 %v411, %v410
  %v485 = vpack.c.b16 %v413, %v412
  %v486 = vpack.c.b16 %v415, %v414
  %v487 = vpack.c.b16 %v417, %v416
  %v488 = vpack.c.b16 %v419, %v418
  %v489 = vpack.c.b16 %v421, %v420
  %v490 = vpack.c.b16 %v423, %v422
  %v491 = vpack.c.b16 %v425, %v424
  %v492 = vpack.c.b16 %v427, %v426
  %v493 = vpack.c.b16 %v429, %v428
  %558 = vmatprep.subr.bf16.mxu0 0
  %559 = vmatpush1.bf16.msra.mxu0 %v437
  %560 = vmatprep.subr.bf16.mxu0 0
  %561 = vmatpush1.bf16.msra.mxu0 %v436
  %562 = vmatprep.subr.bf16.mxu0 0
  %563 = vmatpush1.bf16.msra.mxu0 %v435
  %564 = vmatprep.subr.bf16.mxu0 0
  %565 = vmatpush1.bf16.msra.mxu0 %v434
  %566 = vmatprep.subr.bf16.mxu0 0
  %567 = vmatpush1.bf16.msra.mxu0 %v433
  %568 = vmatprep.subr.bf16.mxu0 0
  %569 = vmatpush1.bf16.msra.mxu0 %v432
  %570 = vmatprep.subr.bf16.mxu0 0
  %571 = vmatpush1.bf16.msra.mxu0 %v431
  %572 = vmatprep.subr.bf16.mxu0 0
  %573 = vmatpush1.bf16.msra.mxu0 %v430
  %574 = vmatprep.subr.bf16.mxu0 0
  %575 = vmatpush2.bf16.msra.mxu0 %v445
  %576 = vmatprep.subr.bf16.mxu0 0
  %577 = vmatpush2.bf16.msra.mxu0 %v444
  %578 = vmatprep.subr.bf16.mxu0 0
  %579 = vmatpush2.bf16.msra.mxu0 %v443
  %580 = vmatprep.subr.bf16.mxu0 0
  %581 = vmatpush2.bf16.msra.mxu0 %v442
  %582 = vmatprep.subr.bf16.mxu0 0
  %583 = vmatpush2.bf16.msra.mxu0 %v441
  %584 = vmatprep.subr.bf16.mxu0 0
  %585 = vmatpush2.bf16.msra.mxu0 %v440
  %586 = vmatprep.subr.bf16.mxu0 0
  %587 = vmatpush2.bf16.msra.mxu0 %v439
  %588 = vmatprep.subr.bf16.mxu0 0
  %589 = vmatpush2.bf16.msra.mxu0 %v438
  %590 = vmatprep.mubr.bf16.mxu0 %v39
  %591 = vmatmul.mubr.bf16.gmra.mxu0 %v38
  %v592 = vpop.f32.mrf.mxu0
  %v593 = vadd.f32 0.0, %v592
  %v594 = vpop.f32.mrf.mxu0
  %v595 = vpop.f32.mrf.mxu0
  %v596 = vpop.f32.mrf.mxu0
  %597 = vdwg.mxu0
  %598 = vmatprep.subr.bf16.mxu0 0
  %599 = vmatpush1.bf16.msra.mxu0 %v453
  %600 = vmatprep.subr.bf16.mxu0 0
  %601 = vmatpush1.bf16.msra.mxu0 %v452
  %602 = vmatprep.subr.bf16.mxu0 0
  %603 = vmatpush1.bf16.msra.mxu0 %v451
  %604 = vmatprep.subr.bf16.mxu0 0
  %605 = vmatpush1.bf16.msra.mxu0 %v450
  %606 = vmatprep.subr.bf16.mxu0 0
  %607 = vmatpush1.bf16.msra.mxu0 %v449
  %608 = vmatprep.subr.bf16.mxu0 0
  %609 = vmatpush1.bf16.msra.mxu0 %v448
  %610 = vmatprep.subr.bf16.mxu0 0
  %611 = vmatpush1.bf16.msra.mxu0 %v447
  %612 = vmatprep.subr.bf16.mxu0 0
  %613 = vmatpush1.bf16.msra.mxu0 %v446
  %614 = vmatprep.subr.bf16.mxu0 0
  %615 = vmatpush2.bf16.msra.mxu0 %v461
  %616 = vmatprep.subr.bf16.mxu0 0
  %617 = vmatpush2.bf16.msra.mxu0 %v460
  %618 = vmatprep.subr.bf16.mxu0 0
  %619 = vmatpush2.bf16.msra.mxu0 %v459
  %620 = vmatprep.subr.bf16.mxu0 0
  %621 = vmatpush2.bf16.msra.mxu0 %v458
  %622 = vmatprep.subr.bf16.mxu0 0
  %623 = vmatpush2.bf16.msra.mxu0 %v457
  %624 = vmatprep.subr.bf16.mxu0 0
  %625 = vmatpush2.bf16.msra.mxu0 %v456
  %626 = vmatprep.subr.bf16.mxu0 0
  %627 = vmatpush2.bf16.msra.mxu0 %v455
  %628 = vmatprep.subr.bf16.mxu0 0
  %629 = vmatpush2.bf16.msra.mxu0 %v454
  %630 = vmatprep.mubr.bf16.mxu0 %v41
  %631 = vmatmul.mubr.bf16.gmra.mxu0 %v40
  %v632 = vpop.f32.mrf.mxu0
  %v633 = vadd.f32 %v593, %v632
  %v634 = vpop.f32.mrf.mxu0
  %v635 = vpop.f32.mrf.mxu0
  %v636 = vpop.f32.mrf.mxu0
  %637 = vdwg.mxu0
  %638 = vmatprep.subr.bf16.mxu0 0
  %639 = vmatpush1.bf16.msra.mxu0 %v469
  %640 = vmatprep.subr.bf16.mxu0 0
  %641 = vmatpush1.bf16.msra.mxu0 %v468
  %642 = vmatprep.subr.bf16.mxu0 0
  %643 = vmatpush1.bf16.msra.mxu0 %v467
  %644 = vmatprep.subr.bf16.mxu0 0
  %645 = vmatpush1.bf16.msra.mxu0 %v466
  %646 = vmatprep.subr.bf16.mxu0 0
  %647 = vmatpush1.bf16.msra.mxu0 %v465
  %648 = vmatprep.subr.bf16.mxu0 0
  %649 = vmatpush1.bf16.msra.mxu0 %v464
  %650 = vmatprep.subr.bf16.mxu0 0
  %651 = vmatpush1.bf16.msra.mxu0 %v463
  %652 = vmatprep.subr.bf16.mxu0 0
  %653 = vmatpush1.bf16.msra.mxu0 %v462
  %654 = vmatprep.subr.bf16.mxu0 0
  %655 = vmatpush2.bf16.msra.mxu0 %v477
  %656 = vmatprep.subr.bf16.mxu0 0
  %657 = vmatpush2.bf16.msra.mxu0 %v476
  %658 = vmatprep.subr.bf16.mxu0 0
  %659 = vmatpush2.bf16.msra.mxu0 %v475
  %660 = vmatprep.subr.bf16.mxu0 0
  %661 = vmatpush2.bf16.msra.mxu0 %v474
  %662 = vmatprep.subr.bf16.mxu0 0
  %663 = vmatpush2.bf16.msra.mxu0 %v473
  %664 = vmatprep.subr.bf16.mxu0 0
  %665 = vmatpush2.bf16.msra.mxu0 %v472
  %666 = vmatprep.subr.bf16.mxu0 0
  %667 = vmatpush2.bf16.msra.mxu0 %v471
  %668 = vmatprep.subr.bf16.mxu0 0
  %669 = vmatpush2.bf16.msra.mxu0 %v470
  %670 = vmatprep.mubr.bf16.mxu0 %v43
  %671 = vmatmul.mubr.bf16.gmra.mxu0 %v42
  %v672 = vpop.f32.mrf.mxu0
  %v673 = vadd.f32 %v633, %v672
  %v674 = vpop.f32.mrf.mxu0
  %v675 = vpop.f32.mrf.mxu0
  %v676 = vpop.f32.mrf.mxu0
  %677 = vdwg.mxu0
  %678 = vmatprep.subr.bf16.mxu0 0
  %679 = vmatpush1.bf16.msra.mxu0 %v485
  %680 = vmatprep.subr.bf16.mxu0 0
  %681 = vmatpush1.bf16.msra.mxu0 %v484
  %682 = vmatprep.subr.bf16.mxu0 0
  %683 = vmatpush1.bf16.msra.mxu0 %v483
  %684 = vmatprep.subr.bf16.mxu0 0
  %685 = vmatpush1.bf16.msra.mxu0 %v482
  %686 = vmatprep.subr.bf16.mxu0 0
  %687 = vmatpush1.bf16.msra.mxu0 %v481
  %688 = vmatprep.subr.bf16.mxu0 0
  %689 = vmatpush1.bf16.msra.mxu0 %v480
  %690 = vmatprep.subr.bf16.mxu0 0
  %691 = vmatpush1.bf16.msra.mxu0 %v479
  %692 = vmatprep.subr.bf16.mxu0 0
  %693 = vmatpush1.bf16.msra.mxu0 %v478
  %694 = vmatprep.subr.bf16.mxu0 0
  %695 = vmatpush2.bf16.msra.mxu0 %v493
  %696 = vmatprep.subr.bf16.mxu0 0
  %697 = vmatpush2.bf16.msra.mxu0 %v492
  %698 = vmatprep.subr.bf16.mxu0 0
  %699 = vmatpush2.bf16.msra.mxu0 %v491
  %700 = vmatprep.subr.bf16.mxu0 0
  %701 = vmatpush2.bf16.msra.mxu0 %v490
  %702 = vmatprep.subr.bf16.mxu0 0
  %703 = vmatpush2.bf16.msra.mxu0 %v489
  %704 = vmatprep.subr.bf16.mxu0 0
  %705 = vmatpush2.bf16.msra.mxu0 %v488
  %706 = vmatprep.subr.bf16.mxu0 0
  %707 = vmatpush2.bf16.msra.mxu0 %v487
  %708 = vmatprep.subr.bf16.mxu0 0
  %709 = vmatpush2.bf16.msra.mxu0 %v486
  %710 = vmatprep.mubr.bf16.mxu0 %v45
  %711 = vmatmul.mubr.bf16.gmra.mxu0 %v44
  %v712 = vpop.f32.mrf.mxu0
  %v713 = vadd.f32 %v673, %v712
  %v714 = vpop.f32.mrf.mxu0
  %v715 = vpop.f32.mrf.mxu0
  %v716 = vpop.f32.mrf.mxu0
  %717 = vdwg.mxu0
  %v718 = vmul.f32 %v713, %v713
  %719 = vrot.lane.b32.xlu0 %v718, 64
  %v720 = vpop.permute.xlu0 %719
  %v721 = vadd.f32 %v718, %v720
  %722 = vmax.xlane.f32.xlu0 %v721
  %v723 = vpop.xlane.xlu0 %722
  %vm724 = vcmp.eq.f32.partialorder %v723, 0.0
  %v725 = vsel %vm724, 1.0, %v723
  %v726 = vrcp.pop %v725
  %v727 = vmul.f32 %v721, %v726
  %v728 = vrsqrt.pop %v727
  %v729 = vmul.f32 %v727, %v728
  %vm730 = vcmp.eq.f32.partialorder %v727, inf
  %v731 = vsel %vm730, %v727, %v729
  %vm732 = vcmp.eq.f32.partialorder %v727, 0.0
  %v733 = vand.u32 %v727, 2147483648
  %v734 = vsel %vm732, %v733, %v731
  %v735 = vpack.c.bf16 %v734, %v734
  %v736 = vld [vmem:[%s2] sm:$0xff]
  %v737 = vld [vmem:[%s2 + $0x8] sm:$0xff]
  %v738 = vld [vmem:[%s2 + $0x10] sm:$0xff]
  %v739 = vld [vmem:[%s2 + $0x18] sm:$0xff]
  %v740 = vld [vmem:[%s2 + $0x20] sm:$0xff]
  %v741 = vld [vmem:[%s2 + $0x28] sm:$0xff]
  %v742 = vld [vmem:[%s2 + $0x30] sm:$0xff]
  %v743 = vld [vmem:[%s2 + $0x38] sm:$0xff]
  %v744 = vld [vmem:[%s2 + $0x40] sm:$0xff]
  %v745 = vld [vmem:[%s2 + $0x48] sm:$0xff]
  %v746 = vld [vmem:[%s2 + $0x50] sm:$0xff]
  %v747 = vld [vmem:[%s2 + $0x58] sm:$0xff]
  %v748 = vld [vmem:[%s2 + $0x60] sm:$0xff]
  %v749 = vld [vmem:[%s2 + $0x68] sm:$0xff]
  %v750 = vld [vmem:[%s2 + $0x70] sm:$0xff]
  %v751 = vld [vmem:[%s2 + $0x78] sm:$0xff]
  %v752 = vld [vmem:[%s2 + $0x80] sm:$0xff]
  %v753 = vld [vmem:[%s2 + $0x88] sm:$0xff]
  %v754 = vld [vmem:[%s2 + $0x90] sm:$0xff]
  %v755 = vld [vmem:[%s2 + $0x98] sm:$0xff]
  %v756 = vld [vmem:[%s2 + $0xa0] sm:$0xff]
  %v757 = vld [vmem:[%s2 + $0xa8] sm:$0xff]
  %v758 = vld [vmem:[%s2 + $0xb0] sm:$0xff]
  %v759 = vld [vmem:[%s2 + $0xb8] sm:$0xff]
  %v760 = vld [vmem:[%s2 + $0xc0] sm:$0xff]
  %v761 = vld [vmem:[%s2 + $0xc8] sm:$0xff]
  %v762 = vld [vmem:[%s2 + $0xd0] sm:$0xff]
  %v763 = vld [vmem:[%s2 + $0xd8] sm:$0xff]
  %v764 = vld [vmem:[%s2 + $0xe0] sm:$0xff]
  %v765 = vld [vmem:[%s2 + $0xe8] sm:$0xff]
  %v766 = vld [vmem:[%s2 + $0xf0] sm:$0xff]
  %v767 = vld [vmem:[%s2 + $0xf8] sm:$0xff]
  %v768 = vld [vmem:[%s3] sm:$0xf]
  %v770 = vlaneseq
  %v771 = vshrl.u32 %v770, 7
  %v772 = vsub.s32 0, %v771
  %v773 = vrot.slane %v768, %v772
  %v774 = vlaneseq
  %v775 = vshrl.u32 %v774, 7
  %v776 = vsub.s32 1, %v775
  %v777 = vrot.slane %v768, %v776
  %v778 = vlaneseq
  %v779 = vshrl.u32 %v778, 7
  %v780 = vsub.s32 2, %v779
  %v781 = vrot.slane %v768, %v780
  %v782 = vlaneseq
  %v783 = vshrl.u32 %v782, 7
  %v784 = vsub.s32 3, %v783
  %v785 = vrot.slane %v768, %v784
  %v822 = vunpack.c.l.b16 %v736
  %v823 = vunpack.c.h.b16 %v736
  %v824 = vunpack.c.l.b16 %v737
  %v825 = vunpack.c.h.b16 %v737
  %v826 = vunpack.c.l.b16 %v738
  %v827 = vunpack.c.h.b16 %v738
  %v828 = vunpack.c.l.b16 %v739
  %v829 = vunpack.c.h.b16 %v739
  %v830 = vunpack.c.l.b16 %v740
  %v831 = vunpack.c.h.b16 %v740
  %v832 = vunpack.c.l.b16 %v741
  %v833 = vunpack.c.h.b16 %v741
  %v834 = vunpack.c.l.b16 %v742
  %v835 = vunpack.c.h.b16 %v742
  %v836 = vunpack.c.l.b16 %v743
  %v837 = vunpack.c.h.b16 %v743
  %v838 = vunpack.c.l.b16 %v744
  %v839 = vunpack.c.h.b16 %v744
  %v840 = vunpack.c.l.b16 %v745
  %v841 = vunpack.c.h.b16 %v745
  %v842 = vunpack.c.l.b16 %v746
  %v843 = vunpack.c.h.b16 %v746
  %v844 = vunpack.c.l.b16 %v747
  %v845 = vunpack.c.h.b16 %v747
  %v846 = vunpack.c.l.b16 %v748
  %v847 = vunpack.c.h.b16 %v748
  %v848 = vunpack.c.l.b16 %v749
  %v849 = vunpack.c.h.b16 %v749
  %v850 = vunpack.c.l.b16 %v750
  %v851 = vunpack.c.h.b16 %v750
  %v852 = vunpack.c.l.b16 %v751
  %v853 = vunpack.c.h.b16 %v751
  %v854 = vunpack.c.l.b16 %v752
  %v855 = vunpack.c.h.b16 %v752
  %v856 = vunpack.c.l.b16 %v753
  %v857 = vunpack.c.h.b16 %v753
  %v858 = vunpack.c.l.b16 %v754
  %v859 = vunpack.c.h.b16 %v754
  %v860 = vunpack.c.l.b16 %v755
  %v861 = vunpack.c.h.b16 %v755
  %v862 = vunpack.c.l.b16 %v756
  %v863 = vunpack.c.h.b16 %v756
  %v864 = vunpack.c.l.b16 %v757
  %v865 = vunpack.c.h.b16 %v757
  %v866 = vunpack.c.l.b16 %v758
  %v867 = vunpack.c.h.b16 %v758
  %v868 = vunpack.c.l.b16 %v759
  %v869 = vunpack.c.h.b16 %v759
  %v870 = vunpack.c.l.b16 %v760
  %v871 = vunpack.c.h.b16 %v760
  %v872 = vunpack.c.l.b16 %v761
  %v873 = vunpack.c.h.b16 %v761
  %v874 = vunpack.c.l.b16 %v762
  %v875 = vunpack.c.h.b16 %v762
  %v876 = vunpack.c.l.b16 %v763
  %v877 = vunpack.c.h.b16 %v763
  %v878 = vunpack.c.l.b16 %v764
  %v879 = vunpack.c.h.b16 %v764
  %v880 = vunpack.c.l.b16 %v765
  %v881 = vunpack.c.h.b16 %v765
  %v882 = vunpack.c.l.b16 %v766
  %v883 = vunpack.c.h.b16 %v766
  %v884 = vunpack.c.l.b16 %v767
  %v885 = vunpack.c.h.b16 %v767
  %v886 = vpack.c.b16 %v826, %v822
  %v887 = vpack.c.b16 %v827, %v823
  %v888 = vpack.c.b16 %v828, %v824
  %v889 = vpack.c.b16 %v829, %v825
  %v890 = vpack.c.b16 %v834, %v830
  %v891 = vpack.c.b16 %v835, %v831
  %v892 = vpack.c.b16 %v836, %v832
  %v893 = vpack.c.b16 %v837, %v833
  %v894 = vpack.c.b16 %v842, %v838
  %v895 = vpack.c.b16 %v843, %v839
  %v896 = vpack.c.b16 %v844, %v840
  %v897 = vpack.c.b16 %v845, %v841
  %v898 = vpack.c.b16 %v850, %v846
  %v899 = vpack.c.b16 %v851, %v847
  %v900 = vpack.c.b16 %v852, %v848
  %v901 = vpack.c.b16 %v853, %v849
  %v902 = vpack.c.b16 %v858, %v854
  %v903 = vpack.c.b16 %v859, %v855
  %v904 = vpack.c.b16 %v860, %v856
  %v905 = vpack.c.b16 %v861, %v857
  %v906 = vpack.c.b16 %v866, %v862
  %v907 = vpack.c.b16 %v867, %v863
  %v908 = vpack.c.b16 %v868, %v864
  %v909 = vpack.c.b16 %v869, %v865
  %v910 = vpack.c.b16 %v874, %v870
  %v911 = vpack.c.b16 %v875, %v871
  %v912 = vpack.c.b16 %v876, %v872
  %v913 = vpack.c.b16 %v877, %v873
  %v914 = vpack.c.b16 %v882, %v878
  %v915 = vpack.c.b16 %v883, %v879
  %v916 = vpack.c.b16 %v884, %v880
  %v917 = vpack.c.b16 %v885, %v881
  %950 = vmatprep.subr.bf16.mxu0 %v915
  %951 = vmatpush1.bf16.msra.mxu0 %v914
  %952 = vmatprep.subr.bf16.mxu0 %v911
  %953 = vmatpush1.bf16.msra.mxu0 %v910
  %954 = vmatprep.subr.bf16.mxu0 %v907
  %955 = vmatpush1.bf16.msra.mxu0 %v906
  %956 = vmatprep.subr.bf16.mxu0 %v903
  %957 = vmatpush1.bf16.msra.mxu0 %v902
  %958 = vmatprep.subr.bf16.mxu0 %v899
  %959 = vmatpush1.bf16.msra.mxu0 %v898
  %960 = vmatprep.subr.bf16.mxu0 %v895
  %961 = vmatpush1.bf16.msra.mxu0 %v894
  %962 = vmatprep.subr.bf16.mxu0 %v891
  %963 = vmatpush1.bf16.msra.mxu0 %v890
  %964 = vmatprep.subr.bf16.mxu0 %v887
  %965 = vmatpush1.bf16.msra.mxu0 %v886
  %966 = vmatprep.subr.bf16.mxu0 0
  %967 = vmatpush2.bf16.msra.mxu0 0
  %968 = vmatprep.subr.bf16.mxu0 0
  %969 = vmatpush2.bf16.msra.mxu0 0
  %970 = vmatprep.subr.bf16.mxu0 0
  %971 = vmatpush2.bf16.msra.mxu0 0
  %972 = vmatprep.subr.bf16.mxu0 0
  %973 = vmatpush2.bf16.msra.mxu0 0
  %974 = vmatprep.subr.bf16.mxu0 0
  %975 = vmatpush2.bf16.msra.mxu0 0
  %976 = vmatprep.subr.bf16.mxu0 0
  %977 = vmatpush2.bf16.msra.mxu0 0
  %978 = vmatprep.subr.bf16.mxu0 0
  %979 = vmatpush2.bf16.msra.mxu0 0
  %980 = vmatprep.subr.bf16.mxu0 0
  %981 = vmatpush2.bf16.msra.mxu0 0
  %982 = vmatprep.mubr.bf16.mxu0 0
  %983 = vmatmul.mubr.bf16.gmra.mxu0 %v735
  %v984 = vpop.f32.mrf.mxu0
  %v985 = vadd.f32 %v773, %v984
  %v986 = vpop.f32.mrf.mxu0
  %v987 = vadd.f32 %v777, %v986
  %v988 = vpop.f32.mrf.mxu0
  %v989 = vpop.f32.mrf.mxu0
  %990 = vdwg.mxu0
  %991 = vmatprep.subr.bf16.mxu0 %v917
  %992 = vmatpush1.bf16.msra.mxu0 %v916
  %993 = vmatprep.subr.bf16.mxu0 %v913
  %994 = vmatpush1.bf16.msra.mxu0 %v912
  %995 = vmatprep.subr.bf16.mxu0 %v909
  %996 = vmatpush1.bf16.msra.mxu0 %v908
  %997 = vmatprep.subr.bf16.mxu0 %v905
  %998 = vmatpush1.bf16.msra.mxu0 %v904
  %999 = vmatprep.subr.bf16.mxu0 %v901
  %1000 = vmatpush1.bf16.msra.mxu0 %v900
  %1001 = vmatprep.subr.bf16.mxu0 %v897
  %1002 = vmatpush1.bf16.msra.mxu0 %v896
  %1003 = vmatprep.subr.bf16.mxu0 %v893
  %1004 = vmatpush1.bf16.msra.mxu0 %v892
  %1005 = vmatprep.subr.bf16.mxu0 %v889
  %1006 = vmatpush1.bf16.msra.mxu0 %v888
  %1007 = vmatprep.subr.bf16.mxu0 0
  %1008 = vmatpush2.bf16.msra.mxu0 0
  %1009 = vmatprep.subr.bf16.mxu0 0
  %1010 = vmatpush2.bf16.msra.mxu0 0
  %1011 = vmatprep.subr.bf16.mxu0 0
  %1012 = vmatpush2.bf16.msra.mxu0 0
  %1013 = vmatprep.subr.bf16.mxu0 0
  %1014 = vmatpush2.bf16.msra.mxu0 0
  %1015 = vmatprep.subr.bf16.mxu0 0
  %1016 = vmatpush2.bf16.msra.mxu0 0
  %1017 = vmatprep.subr.bf16.mxu0 0
  %1018 = vmatpush2.bf16.msra.mxu0 0
  %1019 = vmatprep.subr.bf16.mxu0 0
  %1020 = vmatpush2.bf16.msra.mxu0 0
  %1021 = vmatprep.subr.bf16.mxu0 0
  %1022 = vmatpush2.bf16.msra.mxu0 0
  %1023 = vmatprep.mubr.bf16.mxu0 0
  %1024 = vmatmul.mubr.bf16.gmra.mxu0 %v735
  %v1025 = vpop.f32.mrf.mxu0
  %v1026 = vadd.f32 %v781, %v1025
  %v1027 = vpop.f32.mrf.mxu0
  %v1028 = vadd.f32 %v785, %v1027
  %v1029 = vpop.f32.mrf.mxu0
  %v1030 = vpop.f32.mrf.mxu0
  %1031 = vdwg.mxu0
  %v1032 = vmax.f32 %v985, 0.0
  %v1033 = vmax.f32 %v987, 0.0
  %v1034 = vmax.f32 %v1026, 0.0
  %v1035 = vmax.f32 %v1028, 0.0
  %v1036 = vpack.c.bf16 %v1032, %v1032
  %v1037 = vpack.c.bf16 %v1033, %v1033
  %v1038 = vpack.c.bf16 %v1034, %v1034
  %v1039 = vpack.c.bf16 %v1035, %v1035
  %v1040 = vld [vmem:[%s4] sm:$0xff]
  %v1041 = vld [vmem:[%s4 + $0x8] sm:$0xff]
  %v1042 = vld [vmem:[%s4 + $0x10] sm:$0xff]
  %v1043 = vld [vmem:[%s4 + $0x18] sm:$0xff]
  %v1044 = vld [vmem:[%s4 + $0x20] sm:$0xff]
  %v1045 = vld [vmem:[%s4 + $0x28] sm:$0xff]
  %v1046 = vld [vmem:[%s4 + $0x30] sm:$0xff]
  %v1047 = vld [vmem:[%s4 + $0x38] sm:$0xff]
  %v1048 = vld [vmem:[%s4 + $0x40] sm:$0xff]
  %v1049 = vld [vmem:[%s4 + $0x48] sm:$0xff]
  %v1050 = vld [vmem:[%s4 + $0x50] sm:$0xff]
  %v1051 = vld [vmem:[%s4 + $0x58] sm:$0xff]
  %v1052 = vld [vmem:[%s4 + $0x60] sm:$0xff]
  %v1053 = vld [vmem:[%s4 + $0x68] sm:$0xff]
  %v1054 = vld [vmem:[%s4 + $0x70] sm:$0xff]
  %v1055 = vld [vmem:[%s4 + $0x78] sm:$0xff]
  %v1056 = vld [vmem:[%s4 + $0x80] sm:$0xff]
  %v1057 = vld [vmem:[%s4 + $0x88] sm:$0xff]
  %v1058 = vld [vmem:[%s4 + $0x90] sm:$0xff]
  %v1059 = vld [vmem:[%s4 + $0x98] sm:$0xff]
  %v1060 = vld [vmem:[%s4 + $0xa0] sm:$0xff]
  %v1061 = vld [vmem:[%s4 + $0xa8] sm:$0xff]
  %v1062 = vld [vmem:[%s4 + $0xb0] sm:$0xff]
  %v1063 = vld [vmem:[%s4 + $0xb8] sm:$0xff]
  %v1064 = vld [vmem:[%s4 + $0xc0] sm:$0xff]
  %v1065 = vld [vmem:[%s4 + $0xc8] sm:$0xff]
  %v1066 = vld [vmem:[%s4 + $0xd0] sm:$0xff]
  %v1067 = vld [vmem:[%s4 + $0xd8] sm:$0xff]
  %v1068 = vld [vmem:[%s4 + $0xe0] sm:$0xff]
  %v1069 = vld [vmem:[%s4 + $0xe8] sm:$0xff]
  %v1070 = vld [vmem:[%s4 + $0xf0] sm:$0xff]
  %v1071 = vld [vmem:[%s4 + $0xf8] sm:$0xff]
  %v1072 = vld [vmem:[%s4 + $0x100] sm:$0xff]
  %v1073 = vld [vmem:[%s4 + $0x108] sm:$0xff]
  %v1074 = vld [vmem:[%s4 + $0x110] sm:$0xff]
  %v1075 = vld [vmem:[%s4 + $0x118] sm:$0xff]
  %v1076 = vld [vmem:[%s4 + $0x120] sm:$0xff]
  %v1077 = vld [vmem:[%s4 + $0x128] sm:$0xff]
  %v1078 = vld [vmem:[%s4 + $0x130] sm:$0xff]
  %v1079 = vld [vmem:[%s4 + $0x138] sm:$0xff]
  %v1080 = vld [vmem:[%s4 + $0x140] sm:$0xff]
  %v1081 = vld [vmem:[%s4 + $0x148] sm:$0xff]
  %v1082 = vld [vmem:[%s4 + $0x150] sm:$0xff]
  %v1083 = vld [vmem:[%s4 + $0x158] sm:$0xff]
  %v1084 = vld [vmem:[%s4 + $0x160] sm:$0xff]
  %v1085 = vld [vmem:[%s4 + $0x168] sm:$0xff]
  %v1086 = vld [vmem:[%s4 + $0x170] sm:$0xff]
  %v1087 = vld [vmem:[%s4 + $0x178] sm:$0xff]
  %v1088 = vld [vmem:[%s4 + $0x180] sm:$0xff]
  %v1089 = vld [vmem:[%s4 + $0x188] sm:$0xff]
  %v1090 = vld [vmem:[%s4 + $0x190] sm:$0xff]
  %v1091 = vld [vmem:[%s4 + $0x198] sm:$0xff]
  %v1092 = vld [vmem:[%s4 + $0x1a0] sm:$0xff]
  %v1093 = vld [vmem:[%s4 + $0x1a8] sm:$0xff]
  %v1094 = vld [vmem:[%s4 + $0x1b0] sm:$0xff]
  %v1095 = vld [vmem:[%s4 + $0x1b8] sm:$0xff]
  %v1096 = vld [vmem:[%s4 + $0x1c0] sm:$0xff]
  %v1097 = vld [vmem:[%s4 + $0x1c8] sm:$0xff]
  %v1098 = vld [vmem:[%s4 + $0x1d0] sm:$0xff]
  %v1099 = vld [vmem:[%s4 + $0x1d8] sm:$0xff]
  %v1100 = vld [vmem:[%s4 + $0x1e0] sm:$0xff]
  %v1101 = vld [vmem:[%s4 + $0x1e8] sm:$0xff]
  %v1102 = vld [vmem:[%s4 + $0x1f0] sm:$0xff]
  %v1103 = vld [vmem:[%s4 + $0x1f8] sm:$0xff]
  %v1104 = vld [vmem:[%s5] sm:$0x3]
  %v1106 = vlaneseq
  %v1107 = vshrl.u32 %v1106, 7
  %v1108 = vsub.s32 0, %v1107
  %v1109 = vrot.slane %v1104, %v1108
  %v1110 = vlaneseq
  %v1111 = vshrl.u32 %v1110, 7
  %v1112 = vsub.s32 1, %v1111
  %v1113 = vrot.slane %v1104, %v1112
  %v1180 = vunpack.c.l.b16 %v1040
  %v1181 = vunpack.c.h.b16 %v1040
  %v1182 = vunpack.c.l.b16 %v1041
  %v1183 = vunpack.c.h.b16 %v1041
  %v1184 = vunpack.c.l.b16 %v1042
  %v1185 = vunpack.c.h.b16 %v1042
  %v1186 = vunpack.c.l.b16 %v1043
  %v1187 = vunpack.c.h.b16 %v1043
  %v1188 = vunpack.c.l.b16 %v1044
  %v1189 = vunpack.c.h.b16 %v1044
  %v1190 = vunpack.c.l.b16 %v1045
  %v1191 = vunpack.c.h.b16 %v1045
  %v1192 = vunpack.c.l.b16 %v1046
  %v1193 = vunpack.c.h.b16 %v1046
  %v1194 = vunpack.c.l.b16 %v1047
  %v1195 = vunpack.c.h.b16 %v1047
  %v1196 = vunpack.c.l.b16 %v1048
  %v1197 = vunpack.c.h.b16 %v1048
  %v1198 = vunpack.c.l.b16 %v1049
  %v1199 = vunpack.c.h.b16 %v1049
  %v1200 = vunpack.c.l.b16 %v1050
  %v1201 = vunpack.c.h.b16 %v1050
  %v1202 = vunpack.c.l.b16 %v1051
  %v1203 = vunpack.c.h.b16 %v1051
  %v1204 = vunpack.c.l.b16 %v1052
  %v1205 = vunpack.c.h.b16 %v1052
  %v1206 = vunpack.c.l.b16 %v1053
  %v1207 = vunpack.c.h.b16 %v1053
  %v1208 = vunpack.c.l.b16 %v1054
  %v1209 = vunpack.c.h.b16 %v1054
  %v1210 = vunpack.c.l.b16 %v1055
  %v1211 = vunpack.c.h.b16 %v1055
  %v1212 = vunpack.c.l.b16 %v1056
  %v1213 = vunpack.c.h.b16 %v1056
  %v1214 = vunpack.c.l.b16 %v1057
  %v1215 = vunpack.c.h.b16 %v1057
  %v1216 = vunpack.c.l.b16 %v1058
  %v1217 = vunpack.c.h.b16 %v1058
  %v1218 = vunpack.c.l.b16 %v1059
  %v1219 = vunpack.c.h.b16 %v1059
  %v1220 = vunpack.c.l.b16 %v1060
  %v1221 = vunpack.c.h.b16 %v1060
  %v1222 = vunpack.c.l.b16 %v1061
  %v1223 = vunpack.c.h.b16 %v1061
  %v1224 = vunpack.c.l.b16 %v1062
  %v1225 = vunpack.c.h.b16 %v1062
  %v1226 = vunpack.c.l.b16 %v1063
  %v1227 = vunpack.c.h.b16 %v1063
  %v1228 = vunpack.c.l.b16 %v1064
  %v1229 = vunpack.c.h.b16 %v1064
  %v1230 = vunpack.c.l.b16 %v1065
  %v1231 = vunpack.c.h.b16 %v1065
  %v1232 = vunpack.c.l.b16 %v1066
  %v1233 = vunpack.c.h.b16 %v1066
  %v1234 = vunpack.c.l.b16 %v1067
  %v1235 = vunpack.c.h.b16 %v1067
  %v1236 = vunpack.c.l.b16 %v1068
  %v1237 = vunpack.c.h.b16 %v1068
  %v1238 = vunpack.c.l.b16 %v1069
  %v1239 = vunpack.c.h.b16 %v1069
  %v1240 = vunpack.c.l.b16 %v1070
  %v1241 = vunpack.c.h.b16 %v1070
  %v1242 = vunpack.c.l.b16 %v1071
  %v1243 = vunpack.c.h.b16 %v1071
  %v1244 = vunpack.c.l.b16 %v1072
  %v1245 = vunpack.c.h.b16 %v1072
  %v1246 = vunpack.c.l.b16 %v1073
  %v1247 = vunpack.c.h.b16 %v1073
  %v1248 = vunpack.c.l.b16 %v1074
  %v1249 = vunpack.c.h.b16 %v1074
  %v1250 = vunpack.c.l.b16 %v1075
  %v1251 = vunpack.c.h.b16 %v1075
  %v1252 = vunpack.c.l.b16 %v1076
  %v1253 = vunpack.c.h.b16 %v1076
  %v1254 = vunpack.c.l.b16 %v1077
  %v1255 = vunpack.c.h.b16 %v1077
  %v1256 = vunpack.c.l.b16 %v1078
  %v1257 = vunpack.c.h.b16 %v1078
  %v1258 = vunpack.c.l.b16 %v1079
  %v1259 = vunpack.c.h.b16 %v1079
  %v1260 = vunpack.c.l.b16 %v1080
  %v1261 = vunpack.c.h.b16 %v1080
  %v1262 = vunpack.c.l.b16 %v1081
  %v1263 = vunpack.c.h.b16 %v1081
  %v1264 = vunpack.c.l.b16 %v1082
  %v1265 = vunpack.c.h.b16 %v1082
  %v1266 = vunpack.c.l.b16 %v1083
  %v1267 = vunpack.c.h.b16 %v1083
  %v1268 = vunpack.c.l.b16 %v1084
  %v1269 = vunpack.c.h.b16 %v1084
  %v1270 = vunpack.c.l.b16 %v1085
  %v1271 = vunpack.c.h.b16 %v1085
  %v1272 = vunpack.c.l.b16 %v1086
  %v1273 = vunpack.c.h.b16 %v1086
  %v1274 = vunpack.c.l.b16 %v1087
  %v1275 = vunpack.c.h.b16 %v1087
  %v1276 = vunpack.c.l.b16 %v1088
  %v1277 = vunpack.c.h.b16 %v1088
  %v1278 = vunpack.c.l.b16 %v1089
  %v1279 = vunpack.c.h.b16 %v1089
  %v1280 = vunpack.c.l.b16 %v1090
  %v1281 = vunpack.c.h.b16 %v1090
  %v1282 = vunpack.c.l.b16 %v1091
  %v1283 = vunpack.c.h.b16 %v1091
  %v1284 = vunpack.c.l.b16 %v1092
  %v1285 = vunpack.c.h.b16 %v1092
  %v1286 = vunpack.c.l.b16 %v1093
  %v1287 = vunpack.c.h.b16 %v1093
  %v1288 = vunpack.c.l.b16 %v1094
  %v1289 = vunpack.c.h.b16 %v1094
  %v1290 = vunpack.c.l.b16 %v1095
  %v1291 = vunpack.c.h.b16 %v1095
  %v1292 = vunpack.c.l.b16 %v1096
  %v1293 = vunpack.c.h.b16 %v1096
  %v1294 = vunpack.c.l.b16 %v1097
  %v1295 = vunpack.c.h.b16 %v1097
  %v1296 = vunpack.c.l.b16 %v1098
  %v1297 = vunpack.c.h.b16 %v1098
  %v1298 = vunpack.c.l.b16 %v1099
  %v1299 = vunpack.c.h.b16 %v1099
  %v1300 = vunpack.c.l.b16 %v1100
  %v1301 = vunpack.c.h.b16 %v1100
  %v1302 = vunpack.c.l.b16 %v1101
  %v1303 = vunpack.c.h.b16 %v1101
  %v1304 = vunpack.c.l.b16 %v1102
  %v1305 = vunpack.c.h.b16 %v1102
  %v1306 = vunpack.c.l.b16 %v1103
  %v1307 = vunpack.c.h.b16 %v1103
  %v1308 = vpack.c.b16 %v1182, %v1180
  %v1309 = vpack.c.b16 %v1183, %v1181
  %v1310 = vpack.c.b16 %v1186, %v1184
  %v1311 = vpack.c.b16 %v1187, %v1185
  %v1312 = vpack.c.b16 %v1190, %v1188
  %v1313 = vpack.c.b16 %v1191, %v1189
  %v1314 = vpack.c.b16 %v1194, %v1192
  %v1315 = vpack.c.b16 %v1195, %v1193
  %v1316 = vpack.c.b16 %v1198, %v1196
  %v1317 = vpack.c.b16 %v1199, %v1197
  %v1318 = vpack.c.b16 %v1202, %v1200
  %v1319 = vpack.c.b16 %v1203, %v1201
  %v1320 = vpack.c.b16 %v1206, %v1204
  %v1321 = vpack.c.b16 %v1207, %v1205
  %v1322 = vpack.c.b16 %v1210, %v1208
  %v1323 = vpack.c.b16 %v1211, %v1209
  %v1324 = vpack.c.b16 %v1214, %v1212
  %v1325 = vpack.c.b16 %v1215, %v1213
  %v1326 = vpack.c.b16 %v1218, %v1216
  %v1327 = vpack.c.b16 %v1219, %v1217
  %v1328 = vpack.c.b16 %v1222, %v1220
  %v1329 = vpack.c.b16 %v1223, %v1221
  %v1330 = vpack.c.b16 %v1226, %v1224
  %v1331 = vpack.c.b16 %v1227, %v1225
  %v1332 = vpack.c.b16 %v1230, %v1228
  %v1333 = vpack.c.b16 %v1231, %v1229
  %v1334 = vpack.c.b16 %v1234, %v1232
  %v1335 = vpack.c.b16 %v1235, %v1233
  %v1336 = vpack.c.b16 %v1238, %v1236
  %v1337 = vpack.c.b16 %v1239, %v1237
  %v1338 = vpack.c.b16 %v1242, %v1240
  %v1339 = vpack.c.b16 %v1243, %v1241
  %v1340 = vpack.c.b16 %v1246, %v1244
  %v1341 = vpack.c.b16 %v1247, %v1245
  %v1342 = vpack.c.b16 %v1250, %v1248
  %v1343 = vpack.c.b16 %v1251, %v1249
  %v1344 = vpack.c.b16 %v1254, %v1252
  %v1345 = vpack.c.b16 %v1255, %v1253
  %v1346 = vpack.c.b16 %v1258, %v1256
  %v1347 = vpack.c.b16 %v1259, %v1257
  %v1348 = vpack.c.b16 %v1262, %v1260
  %v1349 = vpack.c.b16 %v1263, %v1261
  %v1350 = vpack.c.b16 %v1266, %v1264
  %v1351 = vpack.c.b16 %v1267, %v1265
  %v1352 = vpack.c.b16 %v1270, %v1268
  %v1353 = vpack.c.b16 %v1271, %v1269
  %v1354 = vpack.c.b16 %v1274, %v1272
  %v1355 = vpack.c.b16 %v1275, %v1273
  %v1356 = vpack.c.b16 %v1278, %v1276
  %v1357 = vpack.c.b16 %v1279, %v1277
  %v1358 = vpack.c.b16 %v1282, %v1280
  %v1359 = vpack.c.b16 %v1283, %v1281
  %v1360 = vpack.c.b16 %v1286, %v1284
  %v1361 = vpack.c.b16 %v1287, %v1285
  %v1362 = vpack.c.b16 %v1290, %v1288
  %v1363 = vpack.c.b16 %v1291, %v1289
  %v1364 = vpack.c.b16 %v1294, %v1292
  %v1365 = vpack.c.b16 %v1295, %v1293
  %v1366 = vpack.c.b16 %v1298, %v1296
  %v1367 = vpack.c.b16 %v1299, %v1297
  %v1368 = vpack.c.b16 %v1302, %v1300
  %v1369 = vpack.c.b16 %v1303, %v1301
  %v1370 = vpack.c.b16 %v1306, %v1304
  %v1371 = vpack.c.b16 %v1307, %v1305
  %1436 = vmatprep.subr.bf16.mxu0 %v1323
  %1437 = vmatpush1.bf16.msra.mxu0 %v1322
  %1438 = vmatprep.subr.bf16.mxu0 %v1321
  %1439 = vmatpush1.bf16.msra.mxu0 %v1320
  %1440 = vmatprep.subr.bf16.mxu0 %v1319
  %1441 = vmatpush1.bf16.msra.mxu0 %v1318
  %1442 = vmatprep.subr.bf16.mxu0 %v1317
  %1443 = vmatpush1.bf16.msra.mxu0 %v1316
  %1444 = vmatprep.subr.bf16.mxu0 %v1315
  %1445 = vmatpush1.bf16.msra.mxu0 %v1314
  %1446 = vmatprep.subr.bf16.mxu0 %v1313
  %1447 = vmatpush1.bf16.msra.mxu0 %v1312
  %1448 = vmatprep.subr.bf16.mxu0 %v1311
  %1449 = vmatpush1.bf16.msra.mxu0 %v1310
  %1450 = vmatprep.subr.bf16.mxu0 %v1309
  %1451 = vmatpush1.bf16.msra.mxu0 %v1308
  %1452 = vmatprep.subr.bf16.mxu0 %v1339
  %1453 = vmatpush2.bf16.msra.mxu0 %v1338
  %1454 = vmatprep.subr.bf16.mxu0 %v1337
  %1455 = vmatpush2.bf16.msra.mxu0 %v1336
  %1456 = vmatprep.subr.bf16.mxu0 %v1335
  %1457 = vmatpush2.bf16.msra.mxu0 %v1334
  %1458 = vmatprep.subr.bf16.mxu0 %v1333
  %1459 = vmatpush2.bf16.msra.mxu0 %v1332
  %1460 = vmatprep.subr.bf16.mxu0 %v1331
  %1461 = vmatpush2.bf16.msra.mxu0 %v1330
  %1462 = vmatprep.subr.bf16.mxu0 %v1329
  %1463 = vmatpush2.bf16.msra.mxu0 %v1328
  %1464 = vmatprep.subr.bf16.mxu0 %v1327
  %1465 = vmatpush2.bf16.msra.mxu0 %v1326
  %1466 = vmatprep.subr.bf16.mxu0 %v1325
  %1467 = vmatpush2.bf16.msra.mxu0 %v1324
  %1468 = vmatprep.mubr.bf16.mxu0 %v1037
  %1469 = vmatmul.mubr.bf16.gmra.mxu0 %v1036
  %v1470 = vpop.f32.mrf.mxu0
  %v1471 = vadd.f32 %v1109, %v1470
  %v1472 = vpop.f32.mrf.mxu0
  %v1473 = vadd.f32 %v1113, %v1472
  %v1474 = vpop.f32.mrf.mxu0
  %v1475 = vpop.f32.mrf.mxu0
  %1476 = vdwg.mxu0
  %1477 = vmatprep.subr.bf16.mxu0 %v1355
  %1478 = vmatpush1.bf16.msra.mxu0 %v1354
  %1479 = vmatprep.subr.bf16.mxu0 %v1353
  %1480 = vmatpush1.bf16.msra.mxu0 %v1352
  %1481 = vmatprep.subr.bf16.mxu0 %v1351
  %1482 = vmatpush1.bf16.msra.mxu0 %v1350
  %1483 = vmatprep.subr.bf16.mxu0 %v1349
  %1484 = vmatpush1.bf16.msra.mxu0 %v1348
  %1485 = vmatprep.subr.bf16.mxu0 %v1347
  %1486 = vmatpush1.bf16.msra.mxu0 %v1346
  %1487 = vmatprep.subr.bf16.mxu0 %v1345
  %1488 = vmatpush1.bf16.msra.mxu0 %v1344
  %1489 = vmatprep.subr.bf16.mxu0 %v1343
  %1490 = vmatpush1.bf16.msra.mxu0 %v1342
  %1491 = vmatprep.subr.bf16.mxu0 %v1341
  %1492 = vmatpush1.bf16.msra.mxu0 %v1340
  %1493 = vmatprep.subr.bf16.mxu0 %v1371
  %1494 = vmatpush2.bf16.msra.mxu0 %v1370
  %1495 = vmatprep.subr.bf16.mxu0 %v1369
  %1496 = vmatpush2.bf16.msra.mxu0 %v1368
  %1497 = vmatprep.subr.bf16.mxu0 %v1367
  %1498 = vmatpush2.bf16.msra.mxu0 %v1366
  %1499 = vmatprep.subr.bf16.mxu0 %v1365
  %1500 = vmatpush2.bf16.msra.mxu0 %v1364
  %1501 = vmatprep.subr.bf16.mxu0 %v1363
  %1502 = vmatpush2.bf16.msra.mxu0 %v1362
  %1503 = vmatprep.subr.bf16.mxu0 %v1361
  %1504 = vmatpush2.bf16.msra.mxu0 %v1360
  %1505 = vmatprep.subr.bf16.mxu0 %v1359
  %1506 = vmatpush2.bf16.msra.mxu0 %v1358
  %1507 = vmatprep.subr.bf16.mxu0 %v1357
  %1508 = vmatpush2.bf16.msra.mxu0 %v1356
  %1509 = vmatprep.mubr.bf16.mxu0 %v1039
  %1510 = vmatmul.mubr.bf16.gmra.mxu0 %v1038
  %v1511 = vpop.f32.mrf.mxu0
  %v1512 = vadd.f32 %v1471, %v1511
  %v1513 = vpop.f32.mrf.mxu0
  %v1514 = vadd.f32 %v1473, %v1513
  %v1515 = vpop.f32.mrf.mxu0
  %v1516 = vpop.f32.mrf.mxu0
  %1517 = vdwg.mxu0
  %v1518 = vmax.f32 %v1512, 0.0
  %v1519 = vmax.f32 %v1514, 0.0
  %v1520 = vpack.c.bf16 %v1518, %v1518
  %v1521 = vpack.c.bf16 %v1519, %v1519
  %v1522 = vld [vmem:[%s6] sm:$0xf]
  %v1523 = vld [vmem:[%s6 + $0x4] sm:$0xf]
  %v1524 = vld [vmem:[%s6 + $0x8] sm:$0xf]
  %v1525 = vld [vmem:[%s6 + $0xc] sm:$0xf]
  %v1526 = vld [vmem:[%s6 + $0x10] sm:$0xf]
  %v1527 = vld [vmem:[%s6 + $0x14] sm:$0xf]
  %v1528 = vld [vmem:[%s6 + $0x18] sm:$0xf]
  %v1529 = vld [vmem:[%s6 + $0x1c] sm:$0xf]
  %v1530 = vld [vmem:[%s6 + $0x20] sm:$0xf]
  %v1531 = vld [vmem:[%s6 + $0x24] sm:$0xf]
  %v1532 = vld [vmem:[%s6 + $0x28] sm:$0xf]
  %v1533 = vld [vmem:[%s6 + $0x2c] sm:$0xf]
  %v1534 = vld [vmem:[%s6 + $0x30] sm:$0xf]
  %v1535 = vld [vmem:[%s6 + $0x34] sm:$0xf]
  %v1536 = vld [vmem:[%s6 + $0x38] sm:$0xf]
  %v1537 = vld [vmem:[%s6 + $0x3c] sm:$0xf]
  %v1538 = vld [vmem:[%s6 + $0x40] sm:$0xf]
  %v1539 = vld [vmem:[%s6 + $0x44] sm:$0xf]
  %v1540 = vld [vmem:[%s6 + $0x48] sm:$0xf]
  %v1541 = vld [vmem:[%s6 + $0x4c] sm:$0xf]
  %v1542 = vld [vmem:[%s6 + $0x50] sm:$0xf]
  %v1543 = vld [vmem:[%s6 + $0x54] sm:$0xf]
  %v1544 = vld [vmem:[%s6 + $0x58] sm:$0xf]
  %v1545 = vld [vmem:[%s6 + $0x5c] sm:$0xf]
  %v1546 = vld [vmem:[%s6 + $0x60] sm:$0xf]
  %v1547 = vld [vmem:[%s6 + $0x64] sm:$0xf]
  %v1548 = vld [vmem:[%s6 + $0x68] sm:$0xf]
  %v1549 = vld [vmem:[%s6 + $0x6c] sm:$0xf]
  %v1550 = vld [vmem:[%s6 + $0x70] sm:$0xf]
  %v1551 = vld [vmem:[%s6 + $0x74] sm:$0xf]
  %v1552 = vld [vmem:[%s6 + $0x78] sm:$0xf]
  %v1553 = vld [vmem:[%s6 + $0x7c] sm:$0xf]
  %v1554 = vld [vmem:[%s7] sm:$0x1]
  %v1556 = vlaneseq
  %v1557 = vshrl.u32 %v1556, 7
  %v1558 = vsub.s32 0, %v1557
  %v1559 = vrot.slane %v1554, %v1558
  %v1593 = vunpack.c.l.b16 %v1522
  %v1594 = vunpack.c.l.b16 %v1523
  %v1595 = vunpack.c.l.b16 %v1524
  %v1596 = vunpack.c.l.b16 %v1525
  %v1597 = vunpack.c.l.b16 %v1526
  %v1598 = vunpack.c.l.b16 %v1527
  %v1599 = vunpack.c.l.b16 %v1528
  %v1600 = vunpack.c.l.b16 %v1529
  %v1601 = vunpack.c.l.b16 %v1530
  %v1602 = vunpack.c.l.b16 %v1531
  %v1603 = vunpack.c.l.b16 %v1532
  %v1604 = vunpack.c.l.b16 %v1533
  %v1605 = vunpack.c.l.b16 %v1534
  %v1606 = vunpack.c.l.b16 %v1535
  %v1607 = vunpack.c.l.b16 %v1536
  %v1608 = vunpack.c.l.b16 %v1537
  %v1609 = vunpack.c.l.b16 %v1538
  %v1610 = vunpack.c.l.b16 %v1539
  %v1611 = vunpack.c.l.b16 %v1540
  %v1612 = vunpack.c.l.b16 %v1541
  %v1613 = vunpack.c.l.b16 %v1542
  %v1614 = vunpack.c.l.b16 %v1543
  %v1615 = vunpack.c.l.b16 %v1544
  %v1616 = vunpack.c.l.b16 %v1545
  %v1617 = vunpack.c.l.b16 %v1546
  %v1618 = vunpack.c.l.b16 %v1547
  %v1619 = vunpack.c.l.b16 %v1548
  %v1620 = vunpack.c.l.b16 %v1549
  %v1621 = vunpack.c.l.b16 %v1550
  %v1622 = vunpack.c.l.b16 %v1551
  %v1623 = vunpack.c.l.b16 %v1552
  %v1624 = vunpack.c.l.b16 %v1553
  %v1625 = vpack.c.b16 %v1594, %v1593
  %v1626 = vpack.c.b16 %v1596, %v1595
  %v1627 = vpack.c.b16 %v1598, %v1597
  %v1628 = vpack.c.b16 %v1600, %v1599
  %v1629 = vpack.c.b16 %v1602, %v1601
  %v1630 = vpack.c.b16 %v1604, %v1603
  %v1631 = vpack.c.b16 %v1606, %v1605
  %v1632 = vpack.c.b16 %v1608, %v1607
  %v1633 = vpack.c.b16 %v1610, %v1609
  %v1634 = vpack.c.b16 %v1612, %v1611
  %v1635 = vpack.c.b16 %v1614, %v1613
  %v1636 = vpack.c.b16 %v1616, %v1615
  %v1637 = vpack.c.b16 %v1618, %v1617
  %v1638 = vpack.c.b16 %v1620, %v1619
  %v1639 = vpack.c.b16 %v1622, %v1621
  %v1640 = vpack.c.b16 %v1624, %v1623
  %1657 = vmatprep.subr.bf16.mxu0 0
  %1658 = vmatpush1.bf16.msra.mxu0 %v1632
  %1659 = vmatprep.subr.bf16.mxu0 0
  %1660 = vmatpush1.bf16.msra.mxu0 %v1631
  %1661 = vmatprep.subr.bf16.mxu0 0
  %1662 = vmatpush1.bf16.msra.mxu0 %v1630
  %1663 = vmatprep.subr.bf16.mxu0 0
  %1664 = vmatpush1.bf16.msra.mxu0 %v1629
  %1665 = vmatprep.subr.bf16.mxu0 0
  %1666 = vmatpush1.bf16.msra.mxu0 %v1628
  %1667 = vmatprep.subr.bf16.mxu0 0
  %1668 = vmatpush1.bf16.msra.mxu0 %v1627
  %1669 = vmatprep.subr.bf16.mxu0 0
  %1670 = vmatpush1.bf16.msra.mxu0 %v1626
  %1671 = vmatprep.subr.bf16.mxu0 0
  %1672 = vmatpush1.bf16.msra.mxu0 %v1625
  %1673 = vmatprep.subr.bf16.mxu0 0
  %1674 = vmatpush2.bf16.msra.mxu0 %v1640
  %1675 = vmatprep.subr.bf16.mxu0 0
  %1676 = vmatpush2.bf16.msra.mxu0 %v1639
  %1677 = vmatprep.subr.bf16.mxu0 0
  %1678 = vmatpush2.bf16.msra.mxu0 %v1638
  %1679 = vmatprep.subr.bf16.mxu0 0
  %1680 = vmatpush2.bf16.msra.mxu0 %v1637
  %1681 = vmatprep.subr.bf16.mxu0 0
  %1682 = vmatpush2.bf16.msra.mxu0 %v1636
  %1683 = vmatprep.subr.bf16.mxu0 0
  %1684 = vmatpush2.bf16.msra.mxu0 %v1635
  %1685 = vmatprep.subr.bf16.mxu0 0
  %1686 = vmatpush2.bf16.msra.mxu0 %v1634
  %1687 = vmatprep.subr.bf16.mxu0 0
  %1688 = vmatpush2.bf16.msra.mxu0 %v1633
  %1689 = vmatprep.mubr.bf16.mxu0 %v1521
  %1690 = vmatmul.mubr.bf16.gmra.mxu0 %v1520
  %v1691 = vpop.f32.mrf.mxu0
  %v1692 = vadd.f32 %v1559, %v1691
  %v1693 = vpop.f32.mrf.mxu0
  %v1694 = vpop.f32.mrf.mxu0
  %v1695 = vpop.f32.mrf.mxu0
  %1696 = vdwg.mxu0
  %1697 = vst [vmem:[%s8] sm:$0xff] %v1692
  // Predicated region
  $region34: #{waveform_vector_embedding.1} parent=0 // pred_check
    _
  $region35: #{waveform_vector_embedding.1} parent=0 // pred_check_branch
    %1699 = sbr.rel (0) target = $region37
  $region36: #{waveform_vector_embedding.1} parent=0 // pred_region
    _
  $region37: #{waveform_vector_embedding.1} parent=0 // pred_fallthru
    _
  // Predicated region
  $region38: #{waveform_vector_embedding.1} parent=0 // pred_check
    _
  $region39: #{waveform_vector_embedding.1} parent=0 // pred_check_branch
    %1701 = sbr.rel (0) target = $region41
  $region40: #{waveform_vector_embedding.1} parent=0 // pred_region
    _
  $region41: #{waveform_vector_embedding.1} parent=0 // pred_fallthru
    _

</llo_original>
